<compile_context>
chip_gen: v5e
topology: v5e:2x2
jax: 0.10.0
libtpu: 0.0.40
codegen_flags: <defaults>
</compile_context>

<pallas_src>
import functools
import math

import jax
import jax.numpy as jnp
from jax.experimental import pallas as pl
from jax.experimental.pallas import tpu as pltpu

_BN_EPS = 1e-5
_NEG_SLOPE = 0.25                 # DarknetConvBlock default neg_slope
_COMPUTE_DTYPE = jnp.bfloat16     # MXU operand dtype (accumulation stays f32)
_OUT_DTYPE = jnp.bfloat16         # kernel writeback dtype (upcast in wrapper)


def _pad_to(n, m):
    return ((n + m - 1) // m) * m


def _pad_ch(c, wdim):
    """Pad channel count to a multiple of 8 such that wdim * c_p % 128 == 0."""
    cp = _pad_to(c, 8)
    while (wdim * cp) % 128 != 0:
        cp += 8
    return cp


def _lrelu(v):
    return jnp.where(v > 0, v, _NEG_SLOPE * v)


# ----------------------------------------------------------------------------
# Fused Pallas kernel: one batch tile (B_TILE images) per grid step.
# Activations live as lane-dense [B_TILE*H, W*Cpad] slabs the whole time.
# ----------------------------------------------------------------------------
def _make_kernel(use_pool, rows):
    """rows = B_TILE * H (static)."""

    def kernel(x_ref, w1_ref, b2_ref, w3_ref, b4_ref,
               s1_ref, s2_ref, s3_ref, s4_ref, mu_ref, md_ref, *rest):
        if use_pool:
            se_ref, so_ref, pe_ref, o_ref = rest
        else:
            (o_ref,) = rest
        f32 = jnp.float32

        def conv1x1(a_bf, w_ref, s_ref):
            y = jnp.dot(a_bf, w_ref[...], preferred_element_type=f32)
            return _lrelu(y + s_ref[...])

        def conv3x3(a32, b_ref, s_ref):
            # dy = +/-1 taps via XLU sublane rolls + per-image boundary masks
            # (no H x H selection matmuls); dx taps live in the banded weights.
            a_mid = a32.astype(_COMPUTE_DTYPE)
            a_up = (pltpu.roll(a32, shift=1, axis=0) * mu_ref[...]
                    ).astype(_COMPUTE_DTYPE)                    # row y -> a[y-1]
            a_dn = (pltpu.roll(a32, shift=rows - 1, axis=0) * md_ref[...]
                    ).astype(_COMPUTE_DTYPE)                    # row y -> a[y+1]
            acc = jnp.dot(a_mid, b_ref[1], preferred_element_type=f32)
            acc = acc + jnp.dot(a_up, b_ref[0], preferred_element_type=f32)
            acc = acc + jnp.dot(a_dn, b_ref[2], preferred_element_type=f32)
            return _lrelu(acc + s_ref[...])

        x = x_ref[...]                                  # [rows, W*C0p] bf16
        y1 = conv1x1(x, w1_ref, s1_ref)                 # f32 [rows, W*Chp]
        y2 = conv3x3(y1, b2_ref, s2_ref)                # f32 [rows, W*C4p]
        y3 = conv1x1(y2.astype(_COMPUTE_DTYPE), w3_ref, s3_ref)
        y4 = conv3x3(y3, b4_ref, s4_ref)                # f32 [rows, W*C4p]

        if use_pool:
            y4b = y4.astype(_COMPUTE_DTYPE)
            # W reduction: even/odd column-group selection (exact bf16 0/1).
            ycol = jnp.maximum(
                jnp.dot(y4b, se_ref[...], preferred_element_type=f32),
                jnp.dot(y4b, so_ref[...], preferred_element_type=f32))
            # H reduction: pair rows via a sublane roll, then ONE even-row
            # selection matmul (bf16).  Row pairs never cross an image
            # boundary because H is even.
            rmax = jnp.maximum(ycol, pltpu.roll(ycol, shift=rows - 1, axis=0))
            o_ref[...] = jnp.dot(pe_ref[...], rmax.astype(_COMPUTE_DTYPE),
                                 preferred_element_type=f32).astype(o_ref.dtype)
        else:
            o_ref[...] = y4.astype(o_ref.dtype)

    return kernel


# ----------------------------------------------------------------------------
# Host-side (traced) weight packing: BN folding, block-diag / banded matrices.
# ----------------------------------------------------------------------------
def _fold_bn(w, b, gamma, beta, mean, var):
    scale = gamma / jnp.sqrt(var + _BN_EPS)
    return w * scale[:, None, None, None], (b - mean) * scale + beta


def _pack_shift(shift, wdim, cout_p):
    cout = shift.shape[0]
    s = jnp.pad(shift, (0, cout_p - cout))
    return jnp.tile(s, wdim)[None, :].astype(jnp.float32)        # [1, W*cout_p]


def _pack_1x1(w, wdim, cin_p, cout_p):
    cout, cin = w.shape[0], w.shape[1]
    m = jnp.pad(w[:, :, 0, 0].T, ((0, cin_p - cin), (0, cout_p - cout)))
    # TODO(synk): once Cp >= 128, switch to plain per-channel [Cin_p, Cout_p]
    #             weights on a [B*H*W, Cp] layout; this W-block-diagonal form
    #             does W x redundant MACs and stores a W x larger weight.
    return jnp.kron(jnp.eye(wdim, dtype=m.dtype), m).astype(_COMPUTE_DTYPE)


def _pack_3x3(w, wdim, cin_p, cout_p):
    cout, cin = w.shape[0], w.shape[1]
    taps = []
    for ky in range(3):
        bk = jnp.zeros((wdim * cin_p, wdim * cout_p), dtype=w.dtype)
        for dx in (-1, 0, 1):
            m = jnp.pad(w[:, :, ky, dx + 1].T,
                        ((0, cin_p - cin), (0, cout_p - cout)))
            bk = bk + jnp.kron(jnp.eye(wdim, k=-dx, dtype=w.dtype), m)
        taps.append(bk)
    # TODO(synk): at realistic Darknet shapes (W, C >= 128) these banded
    #             weights scale as W^2*C^2; tile them over W (extra grid axis)
    #             or go per-channel so they fit v7x's 64 MiB VMEM.
    return jnp.stack(taps, axis=0).astype(_COMPUTE_DTYPE)  # [3, W*cin_p, W*cout_p]


def _row_masks(bt, h):
    # Per-image vertical boundary masks for the rolled dy = +/-1 taps.
    y = jnp.arange(bt * h) % h
    keep_up = (y != 0).astype(jnp.float32)[:, None]       # zero a[y-1] at y == 0
    keep_dn = (y != h - 1).astype(jnp.float32)[:, None]   # zero a[y+1] at y == H-1
    return keep_up, keep_dn


def _pool_matrices(rows, wdim, c_p):
    # Exact 0/1 selection matrices, stored bf16 (bf16 x bf16 MXU path).
    idx_w = jnp.arange(wdim)[:, None]
    eye_c = jnp.eye(c_p, dtype=jnp.float32)
    s_e = jnp.kron((idx_w == 2 * jnp.arange(wdim // 2)[None, :]
                    ).astype(jnp.float32), eye_c)
    s_o = jnp.kron((idx_w == 2 * jnp.arange(wdim // 2)[None, :] + 1
                    ).astype(jnp.float32), eye_c)
    p_e = (jnp.arange(rows)[None, :] == 2 * jnp.arange(rows // 2)[:, None]
           ).astype(jnp.float32)
    return (s_e.astype(_COMPUTE_DTYPE), s_o.astype(_COMPUTE_DTYPE),
            p_e.astype(_COMPUTE_DTYPE))


def _vmem_limit_bytes():
    # Generation-aware: ~96 MiB on v5e/v6e (128 MiB physical), ~48 MiB on v7x.
    try:
        cap = int(pltpu.get_tpu_info().vmem_capacity_bytes)
    except Exception:
        cap = 128 * 1024 * 1024
    return int(min(cap * 3 // 4, 100 * 1024 * 1024))


# ----------------------------------------------------------------------------
# Forward pass (NCHW in / NCHW out, matching the PyTorch module).
# ----------------------------------------------------------------------------
def darknet_bottleneck(x_nchw, all_params, use_pool=True):
    n, cin, h, w = x_nchw.shape
    hid = all_params[0][0].shape[0]
    out_c = all_params[1][0].shape[0]
    if use_pool:
        assert h % 2 == 0 and w % 2 == 0, "2x2/2 max-pool needs even H and W"
    ho, wo = (h // 2, w // 2) if use_pool else (h, w)

    # Lane-dense channel padding: every BlockSpec'd last dim is a multiple of 128.
    c0p = _pad_ch(cin, w)
    chp = _pad_ch(hid, w)
    c4p = _pad_ch(out_c, wo if use_pool else w)
    wc0, wch, wc4 = w * c0p, w * chp, w * c4p
    out_lanes = wo * c4p if use_pool else wc4

    # Batch tile: raise the matmul M dimension (target ~256 rows) and let the
    # BlockSpec pipeline overlap per-tile DMA with compute.
    bt = min(n, max(1, 256 // h))
    if (bt * h) % 8 or (bt * ho) % 8:
        bt = n                      # full-dim (single step) blocks as fallback
    n_pad = _pad_to(n, bt)
    grid = (n_pad // bt,)
    rows = bt * h
    out_rows = bt * ho

    (w1, b1, g1, be1, m1, v1) = all_params[0]
    (w2, b2, g2, be2, m2, v2) = all_params[1]
    (w3, b3, g3, be3, m3, v3) = all_params[2]
    (w4, b4, g4, be4, m4, v4) = all_params[3]

    w1f, sh1 = _fold_bn(w1, b1, g1, be1, m1, v1)
    w2f, sh2 = _fold_bn(w2, b2, g2, be2, m2, v2)
    w3f, sh3 = _fold_bn(w3, b3, g3, be3, m3, v3)
    w4f, sh4 = _fold_bn(w4, b4, g4, be4, m4, v4)

    w1m = _pack_1x1(w1f, w, c0p, chp)
    b2m = _pack_3x3(w2f, w, chp, c4p)
    w3m = _pack_1x1(w3f, w, c4p, chp)
    b4m = _pack_3x3(w4f, w, chp, c4p)
    s1 = _pack_shift(sh1, w, chp)
    s2 = _pack_shift(sh2, w, c4p)
    s3 = _pack_shift(sh3, w, chp)
    s4 = _pack_shift(sh4, w, c4p)
    mu, md = _row_masks(bt, h)

    # Pack NCHW -> [(N_pad*H), W*C0p] bf16 (lane axis is a multiple of 128).
    x = x_nchw
    if n_pad != n:
        x = jnp.pad(x, ((0, n_pad - n), (0, 0), (0, 0), (0, 0)))
    x = jnp.transpose(x, (0, 2, 3, 1))
    x = jnp.pad(x, ((0, 0), (0, 0), (0, 0), (0, c0p - cin)))
    x = x.reshape(n_pad * h, wc0).astype(_COMPUTE_DTYPE)

    inputs = [x, w1m, b2m, w3m, b4m, s1, s2, s3, s4, mu, md]
    if use_pool:
        inputs += list(_pool_matrices(rows, w, c4p))

    def _const_spec(arr):
        nd = arr.ndim
        return pl.BlockSpec(arr.shape, lambda i, _nd=nd: (0,) * _nd)

    in_specs = [pl.BlockSpec((rows, wc0), lambda i: (i, 0))]
    in_specs += [_const_spec(a) for a in inputs[1:]]
    out_specs = pl.BlockSpec((out_rows, out_lanes), lambda i: (i, 0))

    # Advisory cost estimate (per grid step x steps).
    mm = (2 * rows * wc0 * wch                 # conv1 (1x1)
          + 2 * 3 * 2 * rows * wch * wc4       # conv2 + conv4 (3x3, 3 taps each)
          + 2 * rows * wc4 * wch)              # conv3 (1x1)
    if use_pool:
        mm += 2 * 2 * rows * wc4 * out_lanes   # se/so selections
        mm += 2 * out_rows * rows * out_lanes  # pe selection
    bytes_accessed = sum(math.prod(a.shape) * a.dtype.itemsize for a in inputs)
    bytes_accessed += grid[0] * out_rows * out_lanes * jnp.dtype(_OUT_DTYPE).itemsize

    out = pl.pallas_call(
        _make_kernel(use_pool, rows),
        grid=grid,
        out_shape=jax.ShapeDtypeStruct((grid[0] * out_rows, out_lanes), _OUT_DTYPE),
        in_specs=in_specs,
        out_specs=out_specs,
        compiler_params=pltpu.CompilerParams(
            dimension_semantics=("parallel",),
            vmem_limit_bytes=_vmem_limit_bytes()),
        cost_estimate=pl.CostEstimate(
            flops=int(grid[0] * mm), transcendentals=0,
            bytes_accessed=int(bytes_accessed)),
    )(*inputs)

    out = out.reshape(n_pad, ho, wo, c4p)[:n, :, :, :out_c]
    return jnp.transpose(out, (0, 3, 1, 2)).astype(jnp.float32)


# ----------------------------------------------------------------------------
# Deterministic parameter construction
# ----------------------------------------------------------------------------
def _init_block_params(key, in_chan, out_chan, ksize):
    kw, kb, kg, kbe, km, kv = jax.random.split(key, 6)
    w = 0.1 * jax.random.normal(kw, (out_chan, in_chan, ksize, ksize), jnp.float32)
    b = 0.1 * jax.random.normal(kb, (out_chan,), jnp.float32)
    gamma = 1.0 + 0.1 * jax.random.normal(kg, (out_chan,), jnp.float32)
    beta = 0.1 * jax.random.normal(kbe, (out_chan,), jnp.float32)
    mean = 0.1 * jax.random.normal(km, (out_chan,), jnp.float32)
    var = 1.0 + 0.1 * jnp.abs(jax.random.normal(kv, (out_chan,), jnp.float32))
    return (w, b, gamma, beta, mean, var)


def _make_params(key, in_chan, hid_chan, out_chan):
    keys = jax.random.split(key, 4)
    cfg = [(in_chan, hid_chan, 1), (hid_chan, out_chan, 3),
           (out_chan, hid_chan, 1), (hid_chan, out_chan, 3)]
    return [_init_block_params(k, ci, co, ks) for k, (ci, co, ks) in zip(keys, cfg)]


# ----------------------------------------------------------------------------
# Pure-JAX f32 reference (correctness check only)
# ----------------------------------------------------------------------------
def _reference(x_nchw, all_params, use_pool=True):
    x = x_nchw
    ksizes = (1, 3, 1, 3)
    for (w, b, gamma, beta, mean, var), k in zip(all_params, ksizes):
        pad = k // 2
        y = jax.lax.conv_general_dilated(
            x, w, window_strides=(1, 1), padding=[(pad, pad), (pad, pad)],
            dimension_numbers=("NCHW", "OIHW", "NCHW"))
        y = y + b[None, :, None, None]
        scale = gamma / jnp.sqrt(var + _BN_EPS)
        shift = beta - mean * scale
        y = y * scale[None, :, None, None] + shift[None, :, None, None]
        x = jnp.where(y > 0, y, _NEG_SLOPE * y)
    if use_pool:
        x = jax.lax.reduce_window(
            x, -jnp.inf, jax.lax.max,
            window_dimensions=(1, 1, 2, 2), window_strides=(1, 1, 2, 2),
            padding="VALID")
    return x


if __name__ == "__main__":
    key = jax.random.PRNGKey(0)
    k_x, k_p = jax.random.split(key)

    N, in_chan, H, W = 2, 4, 16, 16
    hid_chan, out_chan = 8, 16

    x = jax.random.normal(k_x, (N, in_chan, H, W), jnp.float32)
    params = _make_params(k_p, in_chan, hid_chan, out_chan)

    fwd = jax.jit(functools.partial(darknet_bottleneck, use_pool=True))
    out = jax.block_until_ready(fwd(x, params))

    assert out.shape == (N, out_chan, H // 2, W // 2), out.shape

    ref = _reference(x, params, use_pool=True)
    # bf16 matmul operands + bf16 writeback (f32 accumulation) => loose tolerance.
    if not jnp.allclose(out, ref, atol=5e-2, rtol=5e-2):
        err = float(jnp.max(jnp.abs(out - ref)))
        raise AssertionError(f"Pallas output does not match reference (max err {err})")

    print("KERNEL_OK")
</pallas_src>

<mosaic_0001>
module attributes {stable_mosaic.version = 11 : i64} {
  func.func @kernel(%arg0: i32, %arg1: memref<32x128xbf16, #tpu.memory_space<vmem>>, %arg2: memref<128x128xbf16, #tpu.memory_space<vmem>>, %arg3: memref<3x128x256xbf16, #tpu.memory_space<vmem>>, %arg4: memref<256x128xbf16, #tpu.memory_space<vmem>>, %arg5: memref<3x128x256xbf16, #tpu.memory_space<vmem>>, %arg6: memref<1x128xf32, #tpu.memory_space<vmem>>, %arg7: memref<1x256xf32, #tpu.memory_space<vmem>>, %arg8: memref<1x128xf32, #tpu.memory_space<vmem>>, %arg9: memref<1x256xf32, #tpu.memory_space<vmem>>, %arg10: memref<32x1xf32, #tpu.memory_space<vmem>>, %arg11: memref<32x1xf32, #tpu.memory_space<vmem>>, %arg12: memref<256x128xbf16, #tpu.memory_space<vmem>>, %arg13: memref<256x128xbf16, #tpu.memory_space<vmem>>, %arg14: memref<16x32xbf16, #tpu.memory_space<vmem>>, %arg15: memref<16x128xbf16, #tpu.memory_space<vmem>>) attributes {dimension_semantics = [#tpu.dimension_semantics<parallel>], iteration_bounds = array<i64: 1>, scalar_prefetch = 0 : i64, scratch_operands = 0 : i64, tpu.core_type = #tpu.core_type<tc>, window_params = [{transform_indices = @transform_0, window_bounds = array<i64: 32, 128>}, {pipeline_mode = #tpu.pipeline_mode<synchronous>, transform_indices = @transform_1, window_bounds = array<i64: 128, 128>}, {pipeline_mode = #tpu.pipeline_mode<synchronous>, transform_indices = @transform_2, window_bounds = array<i64: 3, 128, 256>}, {pipeline_mode = #tpu.pipeline_mode<synchronous>, transform_indices = @transform_3, window_bounds = array<i64: 256, 128>}, {pipeline_mode = #tpu.pipeline_mode<synchronous>, transform_indices = @transform_4, window_bounds = array<i64: 3, 128, 256>}, {pipeline_mode = #tpu.pipeline_mode<synchronous>, transform_indices = @transform_5, window_bounds = array<i64: 1, 128>}, {pipeline_mode = #tpu.pipeline_mode<synchronous>, transform_indices = @transform_6, window_bounds = array<i64: 1, 256>}, {pipeline_mode = #tpu.pipeline_mode<synchronous>, transform_indices = @transform_7, window_bounds = array<i64: 1, 128>}, {pipeline_mode = #tpu.pipeline_mode<synchronous>, transform_indices = @transform_8, window_bounds = array<i64: 1, 256>}, {pipeline_mode = #tpu.pipeline_mode<synchronous>, transform_indices = @transform_9, window_bounds = array<i64: 32, 1>}, {pipeline_mode = #tpu.pipeline_mode<synchronous>, transform_indices = @transform_10, window_bounds = array<i64: 32, 1>}, {pipeline_mode = #tpu.pipeline_mode<synchronous>, transform_indices = @transform_11, window_bounds = array<i64: 256, 128>}, {pipeline_mode = #tpu.pipeline_mode<synchronous>, transform_indices = @transform_12, window_bounds = array<i64: 256, 128>}, {pipeline_mode = #tpu.pipeline_mode<synchronous>, transform_indices = @transform_13, window_bounds = array<i64: 16, 32>}, {transform_indices = @transform_14, window_bounds = array<i64: 16, 128>}]} {
    %c0 = arith.constant 0 : index
    %c0_0 = arith.constant 0 : index
    %0 = vector.load %arg1[%c0, %c0_0] : memref<32x128xbf16, #tpu.memory_space<vmem>>, vector<32x128xbf16>
    %c0_1 = arith.constant 0 : index
    %c0_2 = arith.constant 0 : index
    %1 = vector.load %arg2[%c0_1, %c0_2] : memref<128x128xbf16, #tpu.memory_space<vmem>>, vector<128x128xbf16>
    %cst = arith.constant dense<0.000000e+00> : vector<32x128xf32>
    %2 = tpu.matmul %0, %1, %cst {dimension_numbers = #tpu.dot_dimension_numbers<[1], [0], [0], [1], [0, 0, 1, 1], [], []>} : vector<32x128xbf16>, vector<128x128xbf16>, vector<32x128xf32> -> vector<32x128xf32>
    %c0_3 = arith.constant 0 : index
    %c0_4 = arith.constant 0 : index
    %3 = vector.load %arg6[%c0_3, %c0_4] : memref<1x128xf32, #tpu.memory_space<vmem>>, vector<1x128xf32>
    %4 = vector.broadcast %3 : vector<1x128xf32> to vector<32x128xf32>
    %5 = arith.addf %2, %4 : vector<32x128xf32>
    %cst_5 = arith.constant 0.000000e+00 : f32
    %6 = vector.broadcast %cst_5 : f32 to vector<32x128xf32>
    %7 = arith.cmpf ogt, %5, %6 : vector<32x128xf32>
    %cst_6 = arith.constant 2.500000e-01 : f32
    %8 = vector.broadcast %cst_6 : f32 to vector<32x128xf32>
    %9 = arith.mulf %8, %5 : vector<32x128xf32>
    %10 = arith.select %7, %5, %9 : vector<32x128xi1>, vector<32x128xf32>
    %11 = arith.truncf %10 : vector<32x128xf32> to vector<32x128xbf16>
    %c1_i32 = arith.constant 1 : i32
    %12 = tpu.dynamic_rotate %10 by %c1_i32 dim 0 : vector<32x128xf32>, i32 -> vector<32x128xf32>
    %c0_7 = arith.constant 0 : index
    %c0_8 = arith.constant 0 : index
    %13 = vector.load %arg10[%c0_7, %c0_8] : memref<32x1xf32, #tpu.memory_space<vmem>>, vector<32x1xf32>
    %14 = vector.broadcast %13 : vector<32x1xf32> to vector<32x128xf32>
    %15 = arith.mulf %12, %14 : vector<32x128xf32>
    %16 = arith.truncf %15 : vector<32x128xf32> to vector<32x128xbf16>
    %c31_i32 = arith.constant 31 : i32
    %17 = tpu.dynamic_rotate %10 by %c31_i32 dim 0 : vector<32x128xf32>, i32 -> vector<32x128xf32>
    %c0_9 = arith.constant 0 : index
    %c0_10 = arith.constant 0 : index
    %18 = vector.load %arg11[%c0_9, %c0_10] : memref<32x1xf32, #tpu.memory_space<vmem>>, vector<32x1xf32>
    %19 = vector.broadcast %18 : vector<32x1xf32> to vector<32x128xf32>
    %20 = arith.mulf %17, %19 : vector<32x128xf32>
    %21 = arith.truncf %20 : vector<32x128xf32> to vector<32x128xbf16>
    %c1 = arith.constant 1 : index
    %c0_11 = arith.constant 0 : index
    %c0_12 = arith.constant 0 : index
    %22 = vector.load %arg3[%c1, %c0_11, %c0_12] : memref<3x128x256xbf16, #tpu.memory_space<vmem>>, vector<1x128x256xbf16>
    %23 = vector.shape_cast %22 : vector<1x128x256xbf16> to vector<128x256xbf16>
    %cst_13 = arith.constant dense<0.000000e+00> : vector<32x256xf32>
    %24 = tpu.matmul %11, %23, %cst_13 {dimension_numbers = #tpu.dot_dimension_numbers<[1], [0], [0], [1], [0, 0, 1, 1], [], []>} : vector<32x128xbf16>, vector<128x256xbf16>, vector<32x256xf32> -> vector<32x256xf32>
    %c0_14 = arith.constant 0 : index
    %c0_15 = arith.constant 0 : index
    %c0_16 = arith.constant 0 : index
    %25 = vector.load %arg3[%c0_14, %c0_15, %c0_16] : memref<3x128x256xbf16, #tpu.memory_space<vmem>>, vector<1x128x256xbf16>
    %26 = vector.shape_cast %25 : vector<1x128x256xbf16> to vector<128x256xbf16>
    %cst_17 = arith.constant dense<0.000000e+00> : vector<32x256xf32>
    %27 = tpu.matmul %16, %26, %cst_17 {dimension_numbers = #tpu.dot_dimension_numbers<[1], [0], [0], [1], [0, 0, 1, 1], [], []>} : vector<32x128xbf16>, vector<128x256xbf16>, vector<32x256xf32> -> vector<32x256xf32>
    %28 = arith.addf %24, %27 : vector<32x256xf32>
    %c2 = arith.constant 2 : index
    %c0_18 = arith.constant 0 : index
    %c0_19 = arith.constant 0 : index
    %29 = vector.load %arg3[%c2, %c0_18, %c0_19] : memref<3x128x256xbf16, #tpu.memory_space<vmem>>, vector<1x128x256xbf16>
    %30 = vector.shape_cast %29 : vector<1x128x256xbf16> to vector<128x256xbf16>
    %cst_20 = arith.constant dense<0.000000e+00> : vector<32x256xf32>
    %31 = tpu.matmul %21, %30, %cst_20 {dimension_numbers = #tpu.dot_dimension_numbers<[1], [0], [0], [1], [0, 0, 1, 1], [], []>} : vector<32x128xbf16>, vector<128x256xbf16>, vector<32x256xf32> -> vector<32x256xf32>
    %32 = arith.addf %28, %31 : vector<32x256xf32>
    %c0_21 = arith.constant 0 : index
    %c0_22 = arith.constant 0 : index
    %33 = vector.load %arg7[%c0_21, %c0_22] : memref<1x256xf32, #tpu.memory_space<vmem>>, vector<1x256xf32>
    %34 = vector.broadcast %33 : vector<1x256xf32> to vector<32x256xf32>
    %35 = arith.addf %32, %34 : vector<32x256xf32>
    %cst_23 = arith.constant 0.000000e+00 : f32
    %36 = vector.broadcast %cst_23 : f32 to vector<32x256xf32>
    %37 = arith.cmpf ogt, %35, %36 : vector<32x256xf32>
    %cst_24 = arith.constant 2.500000e-01 : f32
    %38 = vector.broadcast %cst_24 : f32 to vector<32x256xf32>
    %39 = arith.mulf %38, %35 : vector<32x256xf32>
    %40 = arith.select %37, %35, %39 : vector<32x256xi1>, vector<32x256xf32>
    %41 = arith.truncf %40 : vector<32x256xf32> to vector<32x256xbf16>
    %c0_25 = arith.constant 0 : index
    %c0_26 = arith.constant 0 : index
    %42 = vector.load %arg4[%c0_25, %c0_26] : memref<256x128xbf16, #tpu.memory_space<vmem>>, vector<256x128xbf16>
    %cst_27 = arith.constant dense<0.000000e+00> : vector<32x128xf32>
    %43 = tpu.matmul %41, %42, %cst_27 {dimension_numbers = #tpu.dot_dimension_numbers<[1], [0], [0], [1], [0, 0, 1, 1], [], []>} : vector<32x256xbf16>, vector<256x128xbf16>, vector<32x128xf32> -> vector<32x128xf32>
    %c0_28 = arith.constant 0 : index
    %c0_29 = arith.constant 0 : index
    %44 = vector.load %arg8[%c0_28, %c0_29] : memref<1x128xf32, #tpu.memory_space<vmem>>, vector<1x128xf32>
    %45 = vector.broadcast %44 : vector<1x128xf32> to vector<32x128xf32>
    %46 = arith.addf %43, %45 : vector<32x128xf32>
    %cst_30 = arith.constant 0.000000e+00 : f32
    %47 = vector.broadcast %cst_30 : f32 to vector<32x128xf32>
    %48 = arith.cmpf ogt, %46, %47 : vector<32x128xf32>
    %cst_31 = arith.constant 2.500000e-01 : f32
    %49 = vector.broadcast %cst_31 : f32 to vector<32x128xf32>
    %50 = arith.mulf %49, %46 : vector<32x128xf32>
    %51 = arith.select %48, %46, %50 : vector<32x128xi1>, vector<32x128xf32>
    %52 = arith.truncf %51 : vector<32x128xf32> to vector<32x128xbf16>
    %c1_i32_32 = arith.constant 1 : i32
    %53 = tpu.dynamic_rotate %51 by %c1_i32_32 dim 0 : vector<32x128xf32>, i32 -> vector<32x128xf32>
    %c0_33 = arith.constant 0 : index
    %c0_34 = arith.constant 0 : index
    %54 = vector.load %arg10[%c0_33, %c0_34] : memref<32x1xf32, #tpu.memory_space<vmem>>, vector<32x1xf32>
    %55 = vector.broadcast %54 : vector<32x1xf32> to vector<32x128xf32>
    %56 = arith.mulf %53, %55 : vector<32x128xf32>
    %57 = arith.truncf %56 : vector<32x128xf32> to vector<32x128xbf16>
    %c31_i32_35 = arith.constant 31 : i32
    %58 = tpu.dynamic_rotate %51 by %c31_i32_35 dim 0 : vector<32x128xf32>, i32 -> vector<32x128xf32>
    %c0_36 = arith.constant 0 : index
    %c0_37 = arith.constant 0 : index
    %59 = vector.load %arg11[%c0_36, %c0_37] : memref<32x1xf32, #tpu.memory_space<vmem>>, vector<32x1xf32>
    %60 = vector.broadcast %59 : vector<32x1xf32> to vector<32x128xf32>
    %61 = arith.mulf %58, %60 : vector<32x128xf32>
    %62 = arith.truncf %61 : vector<32x128xf32> to vector<32x128xbf16>
    %c1_38 = arith.constant 1 : index
    %c0_39 = arith.constant 0 : index
    %c0_40 = arith.constant 0 : index
    %63 = vector.load %arg5[%c1_38, %c0_39, %c0_40] : memref<3x128x256xbf16, #tpu.memory_space<vmem>>, vector<1x128x256xbf16>
    %64 = vector.shape_cast %63 : vector<1x128x256xbf16> to vector<128x256xbf16>
    %cst_41 = arith.constant dense<0.000000e+00> : vector<32x256xf32>
    %65 = tpu.matmul %52, %64, %cst_41 {dimension_numbers = #tpu.dot_dimension_numbers<[1], [0], [0], [1], [0, 0, 1, 1], [], []>} : vector<32x128xbf16>, vector<128x256xbf16>, vector<32x256xf32> -> vector<32x256xf32>
    %c0_42 = arith.constant 0 : index
    %c0_43 = arith.constant 0 : index
    %c0_44 = arith.constant 0 : index
    %66 = vector.load %arg5[%c0_42, %c0_43, %c0_44] : memref<3x128x256xbf16, #tpu.memory_space<vmem>>, vector<1x128x256xbf16>
    %67 = vector.shape_cast %66 : vector<1x128x256xbf16> to vector<128x256xbf16>
    %cst_45 = arith.constant dense<0.000000e+00> : vector<32x256xf32>
    %68 = tpu.matmul %57, %67, %cst_45 {dimension_numbers = #tpu.dot_dimension_numbers<[1], [0], [0], [1], [0, 0, 1, 1], [], []>} : vector<32x128xbf16>, vector<128x256xbf16>, vector<32x256xf32> -> vector<32x256xf32>
    %69 = arith.addf %65, %68 : vector<32x256xf32>
    %c2_46 = arith.constant 2 : index
    %c0_47 = arith.constant 0 : index
    %c0_48 = arith.constant 0 : index
    %70 = vector.load %arg5[%c2_46, %c0_47, %c0_48] : memref<3x128x256xbf16, #tpu.memory_space<vmem>>, vector<1x128x256xbf16>
    %71 = vector.shape_cast %70 : vector<1x128x256xbf16> to vector<128x256xbf16>
    %cst_49 = arith.constant dense<0.000000e+00> : vector<32x256xf32>
    %72 = tpu.matmul %62, %71, %cst_49 {dimension_numbers = #tpu.dot_dimension_numbers<[1], [0], [0], [1], [0, 0, 1, 1], [], []>} : vector<32x128xbf16>, vector<128x256xbf16>, vector<32x256xf32> -> vector<32x256xf32>
    %73 = arith.addf %69, %72 : vector<32x256xf32>
    %c0_50 = arith.constant 0 : index
    %c0_51 = arith.constant 0 : index
    %74 = vector.load %arg9[%c0_50, %c0_51] : memref<1x256xf32, #tpu.memory_space<vmem>>, vector<1x256xf32>
    %75 = vector.broadcast %74 : vector<1x256xf32> to vector<32x256xf32>
    %76 = arith.addf %73, %75 : vector<32x256xf32>
    %cst_52 = arith.constant 0.000000e+00 : f32
    %77 = vector.broadcast %cst_52 : f32 to vector<32x256xf32>
    %78 = arith.cmpf ogt, %76, %77 : vector<32x256xf32>
    %cst_53 = arith.constant 2.500000e-01 : f32
    %79 = vector.broadcast %cst_53 : f32 to vector<32x256xf32>
    %80 = arith.mulf %79, %76 : vector<32x256xf32>
    %81 = arith.select %78, %76, %80 : vector<32x256xi1>, vector<32x256xf32>
    %82 = arith.truncf %81 : vector<32x256xf32> to vector<32x256xbf16>
    %c0_54 = arith.constant 0 : index
    %c0_55 = arith.constant 0 : index
    %83 = vector.load %arg12[%c0_54, %c0_55] : memref<256x128xbf16, #tpu.memory_space<vmem>>, vector<256x128xbf16>
    %cst_56 = arith.constant dense<0.000000e+00> : vector<32x128xf32>
    %84 = tpu.matmul %82, %83, %cst_56 {dimension_numbers = #tpu.dot_dimension_numbers<[1], [0], [0], [1], [0, 0, 1, 1], [], []>} : vector<32x256xbf16>, vector<256x128xbf16>, vector<32x128xf32> -> vector<32x128xf32>
    %c0_57 = arith.constant 0 : index
    %c0_58 = arith.constant 0 : index
    %85 = vector.load %arg13[%c0_57, %c0_58] : memref<256x128xbf16, #tpu.memory_space<vmem>>, vector<256x128xbf16>
    %cst_59 = arith.constant dense<0.000000e+00> : vector<32x128xf32>
    %86 = tpu.matmul %82, %85, %cst_59 {dimension_numbers = #tpu.dot_dimension_numbers<[1], [0], [0], [1], [0, 0, 1, 1], [], []>} : vector<32x256xbf16>, vector<256x128xbf16>, vector<32x128xf32> -> vector<32x128xf32>
    %87 = arith.maximumf %84, %86 : vector<32x128xf32>
    %c31_i32_60 = arith.constant 31 : i32
    %88 = tpu.dynamic_rotate %87 by %c31_i32_60 dim 0 : vector<32x128xf32>, i32 -> vector<32x128xf32>
    %89 = arith.maximumf %87, %88 : vector<32x128xf32>
    %c0_61 = arith.constant 0 : index
    %c0_62 = arith.constant 0 : index
    %90 = vector.load %arg14[%c0_61, %c0_62] : memref<16x32xbf16, #tpu.memory_space<vmem>>, vector<16x32xbf16>
    %91 = arith.truncf %89 : vector<32x128xf32> to vector<32x128xbf16>
    %cst_63 = arith.constant dense<0.000000e+00> : vector<16x128xf32>
    %92 = tpu.matmul %90, %91, %cst_63 {dimension_numbers = #tpu.dot_dimension_numbers<[1], [0], [0], [1], [0, 0, 1, 1], [], []>} : vector<16x32xbf16>, vector<32x128xbf16>, vector<16x128xf32> -> vector<16x128xf32>
    %93 = arith.truncf %92 : vector<16x128xf32> to vector<16x128xbf16>
    %c0_64 = arith.constant 0 : index
    %c0_65 = arith.constant 0 : index
    %94 = vector.load %arg15[%c0_64, %c0_65] : memref<16x128xbf16, #tpu.memory_space<vmem>>, vector<16x128xbf16>
    tpu.vector_store %arg15[%c0_64, %c0_65], %93 {strides = array<i32>} : memref<16x128xbf16, #tpu.memory_space<vmem>>, vector<16x128xbf16>,
    return
  }
  func.func @transform_0(%arg0: i32) -> (i32, i32) {
    %c0_i32 = arith.constant 0 : i32
    %c0_i32_0 = arith.constant 0 : i32
    return %arg0, %c0_i32 : i32, i32
  }
  func.func @transform_1(%arg0: i32) -> (i32, i32) {
    %c0_i32 = arith.constant 0 : i32
    %c0_i32_0 = arith.constant 0 : i32
    %c0_i32_1 = arith.constant 0 : i32
    return %c0_i32, %c0_i32_0 : i32, i32
  }
  func.func @transform_2(%arg0: i32) -> (i32, i32, i32) {
    %c0_i32 = arith.constant 0 : i32
    %c0_i32_0 = arith.constant 0 : i32
    %c0_i32_1 = arith.constant 0 : i32
    %c0_i32_2 = arith.constant 0 : i32
    return %c0_i32, %c0_i32_0, %c0_i32_1 : i32, i32, i32
  }
  func.func @transform_3(%arg0: i32) -> (i32, i32) {
    %c0_i32 = arith.constant 0 : i32
    %c0_i32_0 = arith.constant 0 : i32
    %c0_i32_1 = arith.constant 0 : i32
    return %c0_i32, %c0_i32_0 : i32, i32
  }
  func.func @transform_4(%arg0: i32) -> (i32, i32, i32) {
    %c0_i32 = arith.constant 0 : i32
    %c0_i32_0 = arith.constant 0 : i32
    %c0_i32_1 = arith.constant 0 : i32
    %c0_i32_2 = arith.constant 0 : i32
    return %c0_i32, %c0_i32_0, %c0_i32_1 : i32, i32, i32
  }
  func.func @transform_5(%arg0: i32) -> (i32, i32) {
    %c0_i32 = arith.constant 0 : i32
    %c0_i32_0 = arith.constant 0 : i32
    %c0_i32_1 = arith.constant 0 : i32
    return %c0_i32, %c0_i32_0 : i32, i32
  }
  func.func @transform_6(%arg0: i32) -> (i32, i32) {
    %c0_i32 = arith.constant 0 : i32
    %c0_i32_0 = arith.constant 0 : i32
    %c0_i32_1 = arith.constant 0 : i32
    return %c0_i32, %c0_i32_0 : i32, i32
  }
  func.func @transform_7(%arg0: i32) -> (i32, i32) {
    %c0_i32 = arith.constant 0 : i32
    %c0_i32_0 = arith.constant 0 : i32
    %c0_i32_1 = arith.constant 0 : i32
    return %c0_i32, %c0_i32_0 : i32, i32
  }
  func.func @transform_8(%arg0: i32) -> (i32, i32) {
    %c0_i32 = arith.constant 0 : i32
    %c0_i32_0 = arith.constant 0 : i32
    %c0_i32_1 = arith.constant 0 : i32
    return %c0_i32, %c0_i32_0 : i32, i32
  }
  func.func @transform_9(%arg0: i32) -> (i32, i32) {
    %c0_i32 = arith.constant 0 : i32
    %c0_i32_0 = arith.constant 0 : i32
    %c0_i32_1 = arith.constant 0 : i32
    return %c0_i32, %c0_i32_0 : i32, i32
  }
  func.func @transform_10(%arg0: i32) -> (i32, i32) {
    %c0_i32 = arith.constant 0 : i32
    %c0_i32_0 = arith.constant 0 : i32
    %c0_i32_1 = arith.constant 0 : i32
    return %c0_i32, %c0_i32_0 : i32, i32
  }
  func.func @transform_11(%arg0: i32) -> (i32, i32) {
    %c0_i32 = arith.constant 0 : i32
    %c0_i32_0 = arith.constant 0 : i32
    %c0_i32_1 = arith.constant 0 : i32
    return %c0_i32, %c0_i32_0 : i32, i32
  }
  func.func @transform_12(%arg0: i32) -> (i32, i32) {
    %c0_i32 = arith.constant 0 : i32
    %c0_i32_0 = arith.constant 0 : i32
    %c0_i32_1 = arith.constant 0 : i32
    return %c0_i32, %c0_i32_0 : i32, i32
  }
  func.func @transform_13(%arg0: i32) -> (i32, i32) {
    %c0_i32 = arith.constant 0 : i32
    %c0_i32_0 = arith.constant 0 : i32
    %c0_i32_1 = arith.constant 0 : i32
    return %c0_i32, %c0_i32_0 : i32, i32
  }
  func.func @transform_14(%arg0: i32) -> (i32, i32) {
    %c0_i32 = arith.constant 0 : i32
    %c0_i32_0 = arith.constant 0 : i32
    return %arg0, %c0_i32 : i32, i32
  }
}

</mosaic_0001>

<llo_original>
// kernel: tile.28
$region0: #{tile.28}
  #allocation0 [shape = 's32[1]{0}', space=sflag, size = 0x4, scoped, tag = 'scoped memory for tile.28']
  %s0 = inlined_call_operand.vmem [shape: f32[16], index: 0, kind: input, shape index: {}]
  %s1 = inlined_call_operand.vmem [shape: f32[16,16], index: 1, kind: output, shape index: {}]
  // Predicated region
  $region2: #{tile.28} parent=0 // pred_check
    _
  $region3: #{tile.28} parent=0 // pred_check_branch
    %3 = sbr.rel (0) target = $region5
  $region4: #{tile.28} parent=0 // pred_region
    _
  $region5: #{tile.28} parent=0 // pred_fallthru
    _
  %v4 = vld [vmem:[%s0] ss:$0 sm:$0xff]
  %5 = vst [vmem:[%s1] sm:$0xff] %v4
  %s6 = scalar_lea.vmem %s1, 8
  %7 = vst [vmem:[%s6] sm:$0xff] %v4

// kernel: tile.29
$region0: #{tile.29}
  %s0 = inlined_call_operand.vmem [shape: f32[16,16], index: 0, kind: input, shape index: {}]
  %s1 = inlined_call_operand.vmem [shape: f32[1,256], index: 1, kind: output, shape index: {}]
  $region1: #{tile.29} parent=0
    #allocation0 [shape = 'u8[8192]{0}', space=vmem, size = 0x2000, scoped, tag = 'scoped mem for output reshape']
    %s2 = smov 3
    %v3 = vld [vmem:[%s0] ss:$8 sm:%s2]
    %vm4 = vcmask 130048
    %5 = vst.msk [vmem:[#allocation0] ss:$8 sm:$0x3] %vm4, %v3
    %s6 = scalar_lea.vmem %s0, 7
    %s7 = smov 3
    %v8 = vld [vmem:[%s6] ss:$8 sm:%s7]
    %9 = vrot.lane.b32.xlu0 %v8, 112
    %v10 = vpop.permute.xlu0 %9
    %vm11 = vcmask 1048448
    %12 = vst.msk [vmem:[#allocation0] ss:$8 sm:$0x3] %vm11, %v10
    %s13 = scalar_lea.vmem %s0, 6
    %s14 = smov 3
    %v15 = vld [vmem:[%s13] ss:$8 sm:%s14]
    %16 = vrot.lane.b32.xlu0 %v15, 96
    %v17 = vpop.permute.xlu0 %16
    %vm18 = vcmask 917248
    %19 = vst.msk [vmem:[#allocation0] ss:$8 sm:$0x3] %vm18, %v17
    %s20 = scalar_lea.vmem %s0, 5
    %s21 = smov 3
    %v22 = vld [vmem:[%s20] ss:$8 sm:%s21]
    %23 = vrot.lane.b32.xlu0 %v22, 80
    %v24 = vpop.permute.xlu0 %23
    %vm25 = vcmask 786048
    %26 = vst.msk [vmem:[#allocation0] ss:$8 sm:$0x3] %vm25, %v24
    %s27 = scalar_lea.vmem %s0, 4
    %s28 = smov 3
    %v29 = vld [vmem:[%s27] ss:$8 sm:%s28]
    %30 = vrot.lane.b32.xlu0 %v29, 64
    %v31 = vpop.permute.xlu0 %30
    %vm32 = vcmask 654848
    %33 = vst.msk [vmem:[#allocation0] ss:$8 sm:$0x3] %vm32, %v31
    %s34 = scalar_lea.vmem %s0, 3
    %s35 = smov 3
    %v36 = vld [vmem:[%s34] ss:$8 sm:%s35]
    %37 = vrot.lane.b32.xlu0 %v36, 48
    %v38 = vpop.permute.xlu0 %37
    %vm39 = vcmask 523648
    %40 = vst.msk [vmem:[#allocation0] ss:$8 sm:$0x3] %vm39, %v38
    %s41 = scalar_lea.vmem %s0, 2
    %s42 = smov 3
    %v43 = vld [vmem:[%s41] ss:$8 sm:%s42]
    %44 = vrot.lane.b32.xlu0 %v43, 32
    %v45 = vpop.permute.xlu0 %44
    %vm46 = vcmask 392448
    %47 = vst.msk [vmem:[#allocation0] ss:$8 sm:$0x3] %vm46, %v45
    %s48 = scalar_lea.vmem %s0, 1
    %s49 = smov 3
    %v50 = vld [vmem:[%s48] ss:$8 sm:%s49]
    %51 = vrot.lane.b32.xlu0 %v50, 16
    %v52 = vpop.permute.xlu0 %51
    %vm53 = vcmask 261248
    %54 = vst.msk [vmem:[#allocation0] ss:$8 sm:$0x3] %vm53, %v52
    %s56 = ssub.s32 2, 1
    %v57 = vld [vmem:[#allocation0] sm:%s56]
    %s59 = ssub.s32 2, 1
    %60 = vst [vmem:[%s1] sm:%s59] %v57
    %s61 = scalar_lea.vmem [#allocation0], 8
    %v62 = vld [vmem:[%s61] sm:%s56]
    %s64 = ssub.s32 2, 1
    %s65 = scalar_lea.vmem %s1, 1
    %66 = vst [vmem:[%s65] sm:%s64] %v62

// kernel: tile.23
$region0: #{tile.23}
  #allocation0 [shape = 's32[1]{0}', space=sflag, size = 0x4, scoped, tag = 'scoped memory for tile.23']
  %s0 = inlined_call_operand.vmem [shape: f32[8], index: 0, kind: input, shape index: {}]
  %s1 = inlined_call_operand.vmem [shape: f32[16,8], index: 1, kind: output, shape index: {}]
  // Predicated region
  $region2: #{tile.23} parent=0 // pred_check
    _
  $region3: #{tile.23} parent=0 // pred_check_branch
    %3 = sbr.rel (0) target = $region5
  $region4: #{tile.23} parent=0 // pred_region
    _
  $region5: #{tile.23} parent=0 // pred_fallthru
    _
  %v4 = vld [vmem:[%s0] ss:$0 sm:$0xff]
  %5 = vst [vmem:[%s1] sm:$0xff] %v4
  %s6 = scalar_lea.vmem %s1, 8
  %7 = vst [vmem:[%s6] sm:$0xff] %v4

// kernel: tile.24
$region0: #{tile.24}
  %s0 = inlined_call_operand.vmem [shape: f32[16,8], index: 0, kind: input, shape index: {}]
  %s1 = inlined_call_operand.vmem [shape: f32[1,128], index: 1, kind: output, shape index: {}]
  $region1: #{tile.24} parent=0
    #allocation0 [shape = 'u8[4096]{0}', space=vmem, size = 0x1000, scoped, tag = 'scoped mem for output reshape']
    %v2 = vld [vmem:[%s0] sm:$0x1]
    %vm3 = vcmask 64512
    %4 = vst.msk [vmem:[#allocation0] sm:$0x1] %vm3, %v2
    %s5 = scalar_lea.vmem %s0, 15
    %v6 = vld [vmem:[%s5] sm:$0x1]
    %7 = vrot.lane.b32.xlu0 %v6, 120
    %v8 = vpop.permute.xlu0 %7
    %vm9 = vcmask 1048512
    %10 = vst.msk [vmem:[#allocation0] sm:$0x1] %vm9, %v8
    %s11 = scalar_lea.vmem %s0, 14
    %v12 = vld [vmem:[%s11] sm:$0x1]
    %13 = vrot.lane.b32.xlu0 %v12, 112
    %v14 = vpop.permute.xlu0 %13
    %vm15 = vcmask 982912
    %16 = vst.msk [vmem:[#allocation0] sm:$0x1] %vm15, %v14
    %s17 = scalar_lea.vmem %s0, 13
    %v18 = vld [vmem:[%s17] sm:$0x1]
    %19 = vrot.lane.b32.xlu0 %v18, 104
    %v20 = vpop.permute.xlu0 %19
    %vm21 = vcmask 917312
    %22 = vst.msk [vmem:[#allocation0] sm:$0x1] %vm21, %v20
    %s23 = scalar_lea.vmem %s0, 12
    %v24 = vld [vmem:[%s23] sm:$0x1]
    %25 = vrot.lane.b32.xlu0 %v24, 96
    %v26 = vpop.permute.xlu0 %25
    %vm27 = vcmask 851712
    %28 = vst.msk [vmem:[#allocation0] sm:$0x1] %vm27, %v26
    %s29 = scalar_lea.vmem %s0, 11
    %v30 = vld [vmem:[%s29] sm:$0x1]
    %31 = vrot.lane.b32.xlu0 %v30, 88
    %v32 = vpop.permute.xlu0 %31
    %vm33 = vcmask 786112
    %34 = vst.msk [vmem:[#allocation0] sm:$0x1] %vm33, %v32
    %s35 = scalar_lea.vmem %s0, 10
    %v36 = vld [vmem:[%s35] sm:$0x1]
    %37 = vrot.lane.b32.xlu0 %v36, 80
    %v38 = vpop.permute.xlu0 %37
    %vm39 = vcmask 720512
    %40 = vst.msk [vmem:[#allocation0] sm:$0x1] %vm39, %v38
    %s41 = scalar_lea.vmem %s0, 9
    %v42 = vld [vmem:[%s41] sm:$0x1]
    %43 = vrot.lane.b32.xlu0 %v42, 72
    %v44 = vpop.permute.xlu0 %43
    %vm45 = vcmask 654912
    %46 = vst.msk [vmem:[#allocation0] sm:$0x1] %vm45, %v44
    %s47 = scalar_lea.vmem %s0, 8
    %v48 = vld [vmem:[%s47] sm:$0x1]
    %49 = vrot.lane.b32.xlu0 %v48, 64
    %v50 = vpop.permute.xlu0 %49
    %vm51 = vcmask 589312
    %52 = vst.msk [vmem:[#allocation0] sm:$0x1] %vm51, %v50
    %s53 = scalar_lea.vmem %s0, 7
    %v54 = vld [vmem:[%s53] sm:$0x1]
    %55 = vrot.lane.b32.xlu0 %v54, 56
    %v56 = vpop.permute.xlu0 %55
    %vm57 = vcmask 523712
    %58 = vst.msk [vmem:[#allocation0] sm:$0x1] %vm57, %v56
    %s59 = scalar_lea.vmem %s0, 6
    %v60 = vld [vmem:[%s59] sm:$0x1]
    %61 = vrot.lane.b32.xlu0 %v60, 48
    %v62 = vpop.permute.xlu0 %61
    %vm63 = vcmask 458112
    %64 = vst.msk [vmem:[#allocation0] sm:$0x1] %vm63, %v62
    %s65 = scalar_lea.vmem %s0, 5
    %v66 = vld [vmem:[%s65] sm:$0x1]
    %67 = vrot.lane.b32.xlu0 %v66, 40
    %v68 = vpop.permute.xlu0 %67
    %vm69 = vcmask 392512
    %70 = vst.msk [vmem:[#allocation0] sm:$0x1] %vm69, %v68
    %s71 = scalar_lea.vmem %s0, 4
    %v72 = vld [vmem:[%s71] sm:$0x1]
    %73 = vrot.lane.b32.xlu0 %v72, 32
    %v74 = vpop.permute.xlu0 %73
    %vm75 = vcmask 326912
    %76 = vst.msk [vmem:[#allocation0] sm:$0x1] %vm75, %v74
    %s77 = scalar_lea.vmem %s0, 3
    %v78 = vld [vmem:[%s77] sm:$0x1]
    %79 = vrot.lane.b32.xlu0 %v78, 24
    %v80 = vpop.permute.xlu0 %79
    %vm81 = vcmask 261312
    %82 = vst.msk [vmem:[#allocation0] sm:$0x1] %vm81, %v80
    %s83 = scalar_lea.vmem %s0, 2
    %v84 = vld [vmem:[%s83] sm:$0x1]
    %85 = vrot.lane.b32.xlu0 %v84, 16
    %v86 = vpop.permute.xlu0 %85
    %vm87 = vcmask 195712
    %88 = vst.msk [vmem:[#allocation0] sm:$0x1] %vm87, %v86
    %s89 = scalar_lea.vmem %s0, 1
    %v90 = vld [vmem:[%s89] sm:$0x1]
    %91 = vrot.lane.b32.xlu0 %v90, 8
    %v92 = vpop.permute.xlu0 %91
    %vm93 = vcmask 130112
    %94 = vst.msk [vmem:[#allocation0] sm:$0x1] %vm93, %v92
    %s96 = ssub.s32 2, 1
    %v97 = vld [vmem:[#allocation0] sm:%s96]
    %s99 = ssub.s32 2, 1
    %100 = vst [vmem:[%s1] sm:%s99] %v97

// kernel: darknet_bottleneck.1
$region0: #{darknet_bottleneck.1}
  #allocation0 [shape = 'u32[]', space=smem, size = 0x4, offset = 0x4, fixed_abs, tag = 'smem constant byte address 0x4 - core index']
  #allocation1 [shape = 'u32[72,128]{1,0:T(1,128)}', space=vmem, size = 0x9000, scoped, tag = 'internal scratch']
  %s0 = inlined_call_operand.vmem [shape: bf16[32,128], index: 0, kind: input, shape index: {}]
  %s1 = inlined_call_operand.vmem [shape: bf16[128,128], index: 1, kind: input, shape index: {}]
  %s2 = inlined_call_operand.vmem [shape: bf16[3,128,256], index: 2, kind: input, shape index: {}]
  %s3 = inlined_call_operand.vmem [shape: bf16[256,128], index: 3, kind: input, shape index: {}]
  %s4 = inlined_call_operand.vmem [shape: bf16[3,128,256], index: 4, kind: input, shape index: {}]
  %s5 = inlined_call_operand.vmem [shape: f32[1,128], index: 5, kind: input, shape index: {}]
  %s6 = inlined_call_operand.vmem [shape: f32[1,256], index: 6, kind: input, shape index: {}]
  %s7 = inlined_call_operand.vmem [shape: f32[1,128], index: 7, kind: input, shape index: {}]
  %s8 = inlined_call_operand.vmem [shape: f32[1,256], index: 8, kind: input, shape index: {}]
  %s9 = inlined_call_operand.vmem [shape: f32[32,1], index: 9, kind: input, shape index: {}]
  %s10 = inlined_call_operand.vmem [shape: f32[32,1], index: 10, kind: input, shape index: {}]
  %s11 = inlined_call_operand.vmem [shape: bf16[256,128], index: 11, kind: input, shape index: {}]
  %s12 = inlined_call_operand.vmem [shape: bf16[256,128], index: 12, kind: input, shape index: {}]
  %s13 = inlined_call_operand.vmem [shape: bf16[16,32], index: 13, kind: input, shape index: {}]
  %s14 = inlined_call_operand.vmem [shape: bf16[16,128], index: 14, kind: output, shape index: {}]
  %s15 = sld [smem:[#allocation0]]
  $region66: #{darknet_bottleneck.1} parent=0
    _
  %s17 = ssub.s32 1, %s15
  %s18 = scalar_select 0, %s17, %s15
  // Predicated region
  $region2: #{darknet_bottleneck.1} parent=0 // pred_check
    _
  $region3: #{darknet_bottleneck.1} parent=0 // pred_check_branch
    %20 = sbr.rel (0) target = $region5
  $region4: #{darknet_bottleneck.1} parent=0 // pred_region
    _
  $region5: #{darknet_bottleneck.1} parent=0 // pred_fallthru
    _
  // Predicated region
  $region6: #{darknet_bottleneck.1} parent=0 // pred_check
    _
  $region7: #{darknet_bottleneck.1} parent=0 // pred_check_branch
    %22 = sbr.rel (0) target = $region9
  $region8: #{darknet_bottleneck.1} parent=0 // pred_region
    _
  $region9: #{darknet_bottleneck.1} parent=0 // pred_fallthru
    _
  // Predicated region
  $region10: #{darknet_bottleneck.1} parent=0 // pred_check
    _
  $region11: #{darknet_bottleneck.1} parent=0 // pred_check_branch
    %24 = sbr.rel (0) target = $region13
  $region12: #{darknet_bottleneck.1} parent=0 // pred_region
    _
  $region13: #{darknet_bottleneck.1} parent=0 // pred_fallthru
    _
  // Predicated region
  $region14: #{darknet_bottleneck.1} parent=0 // pred_check
    _
  $region15: #{darknet_bottleneck.1} parent=0 // pred_check_branch
    %26 = sbr.rel (0) target = $region17
  $region16: #{darknet_bottleneck.1} parent=0 // pred_region
    _
  $region17: #{darknet_bottleneck.1} parent=0 // pred_fallthru
    _
  // Predicated region
  $region18: #{darknet_bottleneck.1} parent=0 // pred_check
    _
  $region19: #{darknet_bottleneck.1} parent=0 // pred_check_branch
    %28 = sbr.rel (0) target = $region21
  $region20: #{darknet_bottleneck.1} parent=0 // pred_region
    _
  $region21: #{darknet_bottleneck.1} parent=0 // pred_fallthru
    _
  // Predicated region
  $region22: #{darknet_bottleneck.1} parent=0 // pred_check
    _
  $region23: #{darknet_bottleneck.1} parent=0 // pred_check_branch
    %30 = sbr.rel (0) target = $region25
  $region24: #{darknet_bottleneck.1} parent=0 // pred_region
    _
  $region25: #{darknet_bottleneck.1} parent=0 // pred_fallthru
    _
  // Predicated region
  $region26: #{darknet_bottleneck.1} parent=0 // pred_check
    _
  $region27: #{darknet_bottleneck.1} parent=0 // pred_check_branch
    %32 = sbr.rel (0) target = $region29
  $region28: #{darknet_bottleneck.1} parent=0 // pred_region
    _
  $region29: #{darknet_bottleneck.1} parent=0 // pred_fallthru
    _
  // Predicated region
  $region30: #{darknet_bottleneck.1} parent=0 // pred_check
    _
  $region31: #{darknet_bottleneck.1} parent=0 // pred_check_branch
    %34 = sbr.rel (0) target = $region33
  $region32: #{darknet_bottleneck.1} parent=0 // pred_region
    _
  $region33: #{darknet_bottleneck.1} parent=0 // pred_fallthru
    _
  // Predicated region
  $region34: #{darknet_bottleneck.1} parent=0 // pred_check
    _
  $region35: #{darknet_bottleneck.1} parent=0 // pred_check_branch
    %36 = sbr.rel (0) target = $region37
  $region36: #{darknet_bottleneck.1} parent=0 // pred_region
    _
  $region37: #{darknet_bottleneck.1} parent=0 // pred_fallthru
    _
  // Predicated region
  $region38: #{darknet_bottleneck.1} parent=0 // pred_check
    _
  $region39: #{darknet_bottleneck.1} parent=0 // pred_check_branch
    %38 = sbr.rel (0) target = $region41
  $region40: #{darknet_bottleneck.1} parent=0 // pred_region
    _
  $region41: #{darknet_bottleneck.1} parent=0 // pred_fallthru
    _
  // Predicated region
  $region42: #{darknet_bottleneck.1} parent=0 // pred_check
    _
  $region43: #{darknet_bottleneck.1} parent=0 // pred_check_branch
    %40 = sbr.rel (0) target = $region45
  $region44: #{darknet_bottleneck.1} parent=0 // pred_region
    _
  $region45: #{darknet_bottleneck.1} parent=0 // pred_fallthru
    _
  // Predicated region
  $region46: #{darknet_bottleneck.1} parent=0 // pred_check
    _
  $region47: #{darknet_bottleneck.1} parent=0 // pred_check_branch
    %42 = sbr.rel (0) target = $region49
  $region48: #{darknet_bottleneck.1} parent=0 // pred_region
    _
  $region49: #{darknet_bottleneck.1} parent=0 // pred_fallthru
    _
  // Predicated region
  $region50: #{darknet_bottleneck.1} parent=0 // pred_check
    _
  $region51: #{darknet_bottleneck.1} parent=0 // pred_check_branch
    %44 = sbr.rel (0) target = $region53
  $region52: #{darknet_bottleneck.1} parent=0 // pred_region
    _
  $region53: #{darknet_bottleneck.1} parent=0 // pred_fallthru
    _
  // Predicated region
  $region54: #{darknet_bottleneck.1} parent=0 // pred_check
    _
  $region55: #{darknet_bottleneck.1} parent=0 // pred_check_branch
    %46 = sbr.rel (0) target = $region57
  $region56: #{darknet_bottleneck.1} parent=0 // pred_region
    _
  $region57: #{darknet_bottleneck.1} parent=0 // pred_fallthru
    _
  %v48 = vld [vmem:[%s0] sm:$0xf]
  %v49 = vld [vmem:[%s0 + $0x4] sm:$0xf]
  %v50 = vld [vmem:[%s0 + $0x8] sm:$0xf]
  %v51 = vld [vmem:[%s0 + $0xc] sm:$0xf]
  %v52 = vld [vmem:[%s1] sm:$0xf]
  %v53 = vld [vmem:[%s1 + $0x4] sm:$0xf]
  %v54 = vld [vmem:[%s1 + $0x8] sm:$0xf]
  %v55 = vld [vmem:[%s1 + $0xc] sm:$0xf]
  %v56 = vld [vmem:[%s1 + $0x10] sm:$0xf]
  %v57 = vld [vmem:[%s1 + $0x14] sm:$0xf]
  %v58 = vld [vmem:[%s1 + $0x18] sm:$0xf]
  %v59 = vld [vmem:[%s1 + $0x1c] sm:$0xf]
  %v60 = vld [vmem:[%s1 + $0x20] sm:$0xf]
  %v61 = vld [vmem:[%s1 + $0x24] sm:$0xf]
  %v62 = vld [vmem:[%s1 + $0x28] sm:$0xf]
  %v63 = vld [vmem:[%s1 + $0x2c] sm:$0xf]
  %v64 = vld [vmem:[%s1 + $0x30] sm:$0xf]
  %v65 = vld [vmem:[%s1 + $0x34] sm:$0xf]
  %v66 = vld [vmem:[%s1 + $0x38] sm:$0xf]
  %v67 = vld [vmem:[%s1 + $0x3c] sm:$0xf]
  %v68 = vld [vmem:[%s5] sm:$0x1]
  %v70 = vperm.slane %v68, 0
  %v76 = vunpack.c.l.b16 %v48
  %v77 = vunpack.c.l.b16 %v49
  %v78 = vunpack.c.l.b16 %v50
  %v79 = vunpack.c.l.b16 %v51
  %v80 = vpack.c.b16 %v77, %v76
  %v81 = vpack.c.b16 %v79, %v78
  %v100 = vunpack.c.l.b16 %v52
  %v101 = vunpack.c.l.b16 %v53
  %v102 = vunpack.c.l.b16 %v54
  %v103 = vunpack.c.l.b16 %v55
  %v104 = vunpack.c.l.b16 %v56
  %v105 = vunpack.c.l.b16 %v57
  %v106 = vunpack.c.l.b16 %v58
  %v107 = vunpack.c.l.b16 %v59
  %v108 = vunpack.c.l.b16 %v60
  %v109 = vunpack.c.l.b16 %v61
  %v110 = vunpack.c.l.b16 %v62
  %v111 = vunpack.c.l.b16 %v63
  %v112 = vunpack.c.l.b16 %v64
  %v113 = vunpack.c.l.b16 %v65
  %v114 = vunpack.c.l.b16 %v66
  %v115 = vunpack.c.l.b16 %v67
  %v116 = vpack.c.b16 %v101, %v100
  %v117 = vpack.c.b16 %v103, %v102
  %v118 = vpack.c.b16 %v105, %v104
  %v119 = vpack.c.b16 %v107, %v106
  %v120 = vpack.c.b16 %v109, %v108
  %v121 = vpack.c.b16 %v111, %v110
  %v122 = vpack.c.b16 %v113, %v112
  %v123 = vpack.c.b16 %v115, %v114
  %132 = vmatpush.bf16.msra.mxu0 %v123
  %133 = vmatpush.bf16.msra.mxu0 %v122
  %134 = vmatpush.bf16.msra.mxu0 %v121
  %135 = vmatpush.bf16.msra.mxu0 %v120
  %136 = vmatpush.bf16.msra.mxu0 %v119
  %137 = vmatpush.bf16.msra.mxu0 %v118
  %138 = vmatpush.bf16.msra.mxu0 %v117
  %139 = vmatpush.bf16.msra.mxu0 %v116
  %140 = vmatmul.bf16.gmra.mxu0 %v80
  %v141 = vpop.f32.mrf.mxu0
  %v142 = vadd.f32 %v70, %v141
  %v143 = vpop.f32.mrf.mxu0
  %v144 = vadd.f32 %v70, %v143
  %145 = vmatmul.bf16.gmra.mxu0 %v81
  %v146 = vpop.f32.mrf.mxu0
  %v147 = vadd.f32 %v70, %v146
  %v148 = vpop.f32.mrf.mxu0
  %v149 = vadd.f32 %v70, %v148
  %150 = vdwg.mxu0
  %vm151 = vcmp.gt.f32.partialorder %v142, 0.0
  %vm152 = vcmp.gt.f32.partialorder %v144, 0.0
  %vm153 = vcmp.gt.f32.partialorder %v147, 0.0
  %vm154 = vcmp.gt.f32.partialorder %v149, 0.0
  %v155 = vmul.f32 %v142, 0.25
  %v156 = vmul.f32 %v144, 0.25
  %v157 = vmul.f32 %v147, 0.25
  %v158 = vmul.f32 %v149, 0.25
  %v159 = vsel %vm151, %v142, %v155
  %v160 = vsel %vm152, %v144, %v156
  %v161 = vsel %vm153, %v147, %v157
  %v162 = vsel %vm154, %v149, %v158
  %v163 = vpack.c.bf16 %v160, %v159
  %v164 = vpack.c.bf16 %v162, %v161
  %v165 = vrot.slane %v159, 7
  %v166 = vrot.slane %v160, 7
  %v167 = vrot.slane %v161, 7
  %v168 = vrot.slane %v162, 7
  %v169 = vlaneseq
  %v170 = vshrl.u32 %v169, 7
  %vm171 = vcmp.lt.s32.totalorder %v170, 1
  %v172 = vsel %vm171, %v167, %v168
  %v173 = vsel %vm171, %v166, %v167
  %v174 = vsel %vm171, %v165, %v166
  %v175 = vsel %vm171, %v168, %v165
  %v176 = vld [vmem:[%s9] sm:$0xff]
  %v177 = vld [vmem:[%s9 + $0x8] sm:$0xff]
  %v178 = vld [vmem:[%s9 + $0x10] sm:$0xff]
  %v179 = vld [vmem:[%s9 + $0x18] sm:$0xff]
  %181 = vset.pattern.permute.xlu0 0
  %182 = vperm.xlu0 %181, %v176
  %v183 = vpop.permute.xlu0 %182
  %186 = vset.pattern.permute.xlu0 0
  %187 = vperm.xlu0 %186, %v177
  %v188 = vpop.permute.xlu0 %187
  %191 = vset.pattern.permute.xlu0 0
  %192 = vperm.xlu0 %191, %v178
  %v193 = vpop.permute.xlu0 %192
  %196 = vset.pattern.permute.xlu0 0
  %197 = vperm.xlu0 %196, %v179
  %v198 = vpop.permute.xlu0 %197
  %v200 = vmul.f32 %v175, %v183
  %v201 = vmul.f32 %v174, %v188
  %v202 = vmul.f32 %v173, %v193
  %v203 = vmul.f32 %v172, %v198
  %v204 = vpack.c.bf16 %v201, %v200
  %v205 = vpack.c.bf16 %v203, %v202
  %v206 = vrot.slane %v159, 1
  %v207 = vrot.slane %v160, 1
  %v208 = vrot.slane %v161, 1
  %v209 = vrot.slane %v162, 1
  %vm210 = vcmp.lt.s32.totalorder %v170, 7
  %v211 = vsel %vm210, %v208, %v209
  %v212 = vsel %vm210, %v207, %v208
  %v213 = vsel %vm210, %v206, %v207
  %v214 = vsel %vm210, %v209, %v206
  %v215 = vld [vmem:[%s10] sm:$0xff]
  %v216 = vld [vmem:[%s10 + $0x8] sm:$0xff]
  %v217 = vld [vmem:[%s10 + $0x10] sm:$0xff]
  %v218 = vld [vmem:[%s10 + $0x18] sm:$0xff]
  %220 = vset.pattern.permute.xlu0 0
  %221 = vperm.xlu0 %220, %v215
  %v222 = vpop.permute.xlu0 %221
  %225 = vset.pattern.permute.xlu0 0
  %226 = vperm.xlu0 %225, %v216
  %v227 = vpop.permute.xlu0 %226
  %230 = vset.pattern.permute.xlu0 0
  %231 = vperm.xlu0 %230, %v217
  %v232 = vpop.permute.xlu0 %231
  %235 = vset.pattern.permute.xlu0 0
  %236 = vperm.xlu0 %235, %v218
  %v237 = vpop.permute.xlu0 %236
  %v239 = vmul.f32 %v213, %v222
  %v240 = vmul.f32 %v212, %v227
  %v241 = vmul.f32 %v211, %v232
  %v242 = vmul.f32 %v214, %v237
  %v243 = vpack.c.bf16 %v240, %v239
  %v244 = vpack.c.bf16 %v242, %v241
  %s245 = scalar_lea.vmem %s2, 128
  %v246 = vld [vmem:[%s245] sm:$0xff]
  %v247 = vld [vmem:[%s245 + $0x8] sm:$0xff]
  %v248 = vld [vmem:[%s245 + $0x10] sm:$0xff]
  %v249 = vld [vmem:[%s245 + $0x18] sm:$0xff]
  %v250 = vld [vmem:[%s245 + $0x20] sm:$0xff]
  %v251 = vld [vmem:[%s245 + $0x28] sm:$0xff]
  %v252 = vld [vmem:[%s245 + $0x30] sm:$0xff]
  %v253 = vld [vmem:[%s245 + $0x38] sm:$0xff]
  %v254 = vld [vmem:[%s245 + $0x40] sm:$0xff]
  %v255 = vld [vmem:[%s245 + $0x48] sm:$0xff]
  %v256 = vld [vmem:[%s245 + $0x50] sm:$0xff]
  %v257 = vld [vmem:[%s245 + $0x58] sm:$0xff]
  %v258 = vld [vmem:[%s245 + $0x60] sm:$0xff]
  %v259 = vld [vmem:[%s245 + $0x68] sm:$0xff]
  %v260 = vld [vmem:[%s245 + $0x70] sm:$0xff]
  %v261 = vld [vmem:[%s245 + $0x78] sm:$0xff]
  %v262 = vld [vmem:[%s2] sm:$0xff]
  %v263 = vld [vmem:[%s2 + $0x8] sm:$0xff]
  %v264 = vld [vmem:[%s2 + $0x10] sm:$0xff]
  %v265 = vld [vmem:[%s2 + $0x18] sm:$0xff]
  %v266 = vld [vmem:[%s2 + $0x20] sm:$0xff]
  %v267 = vld [vmem:[%s2 + $0x28] sm:$0xff]
  %v268 = vld [vmem:[%s2 + $0x30] sm:$0xff]
  %v269 = vld [vmem:[%s2 + $0x38] sm:$0xff]
  %v270 = vld [vmem:[%s2 + $0x40] sm:$0xff]
  %v271 = vld [vmem:[%s2 + $0x48] sm:$0xff]
  %v272 = vld [vmem:[%s2 + $0x50] sm:$0xff]
  %v273 = vld [vmem:[%s2 + $0x58] sm:$0xff]
  %v274 = vld [vmem:[%s2 + $0x60] sm:$0xff]
  %v275 = vld [vmem:[%s2 + $0x68] sm:$0xff]
  %v276 = vld [vmem:[%s2 + $0x70] sm:$0xff]
  %v277 = vld [vmem:[%s2 + $0x78] sm:$0xff]
  %v294 = vunpack.c.l.b16 %v262
  %v295 = vunpack.c.h.b16 %v262
  %v296 = vunpack.c.l.b16 %v263
  %v297 = vunpack.c.h.b16 %v263
  %v298 = vunpack.c.l.b16 %v264
  %v299 = vunpack.c.h.b16 %v264
  %v300 = vunpack.c.l.b16 %v265
  %v301 = vunpack.c.h.b16 %v265
  %v302 = vunpack.c.l.b16 %v266
  %v303 = vunpack.c.h.b16 %v266
  %v304 = vunpack.c.l.b16 %v267
  %v305 = vunpack.c.h.b16 %v267
  %v306 = vunpack.c.l.b16 %v268
  %v307 = vunpack.c.h.b16 %v268
  %v308 = vunpack.c.l.b16 %v269
  %v309 = vunpack.c.h.b16 %v269
  %v310 = vunpack.c.l.b16 %v270
  %v311 = vunpack.c.h.b16 %v270
  %v312 = vunpack.c.l.b16 %v271
  %v313 = vunpack.c.h.b16 %v271
  %v314 = vunpack.c.l.b16 %v272
  %v315 = vunpack.c.h.b16 %v272
  %v316 = vunpack.c.l.b16 %v273
  %v317 = vunpack.c.h.b16 %v273
  %v318 = vunpack.c.l.b16 %v274
  %v319 = vunpack.c.h.b16 %v274
  %v320 = vunpack.c.l.b16 %v275
  %v321 = vunpack.c.h.b16 %v275
  %v322 = vunpack.c.l.b16 %v276
  %v323 = vunpack.c.h.b16 %v276
  %v324 = vunpack.c.l.b16 %v277
  %v325 = vunpack.c.h.b16 %v277
  %v326 = vpack.c.b16 %v296, %v294
  %v327 = vpack.c.b16 %v297, %v295
  %v328 = vpack.c.b16 %v300, %v298
  %v329 = vpack.c.b16 %v301, %v299
  %v330 = vpack.c.b16 %v304, %v302
  %v331 = vpack.c.b16 %v305, %v303
  %v332 = vpack.c.b16 %v308, %v306
  %v333 = vpack.c.b16 %v309, %v307
  %v334 = vpack.c.b16 %v312, %v310
  %v335 = vpack.c.b16 %v313, %v311
  %v336 = vpack.c.b16 %v316, %v314
  %v337 = vpack.c.b16 %v317, %v315
  %v338 = vpack.c.b16 %v320, %v318
  %v339 = vpack.c.b16 %v321, %v319
  %v340 = vpack.c.b16 %v324, %v322
  %v341 = vpack.c.b16 %v325, %v323
  %358 = vmatpush.bf16.msra.mxu0 %v340
  %359 = vmatpush.bf16.msra.mxu0 %v338
  %360 = vmatpush.bf16.msra.mxu0 %v336
  %361 = vmatpush.bf16.msra.mxu0 %v334
  %362 = vmatpush.bf16.msra.mxu0 %v332
  %363 = vmatpush.bf16.msra.mxu0 %v330
  %364 = vmatpush.bf16.msra.mxu0 %v328
  %365 = vmatpush.bf16.msra.mxu0 %v326
  %366 = vmatmul.bf16.gmra.mxu0 %v204
  %v367 = vpop.f32.mrf.mxu0
  %v368 = vadd.f32 0.0, %v367
  %v369 = vpop.f32.mrf.mxu0
  %v370 = vadd.f32 0.0, %v369
  %371 = vmatmul.bf16.gmra.mxu0 %v205
  %v372 = vpop.f32.mrf.mxu0
  %v373 = vadd.f32 0.0, %v372
  %v374 = vpop.f32.mrf.mxu0
  %v375 = vadd.f32 0.0, %v374
  %376 = vdwg.mxu0
  %377 = vmatpush.bf16.msra.mxu0 %v341
  %378 = vmatpush.bf16.msra.mxu0 %v339
  %379 = vmatpush.bf16.msra.mxu0 %v337
  %380 = vmatpush.bf16.msra.mxu0 %v335
  %381 = vmatpush.bf16.msra.mxu0 %v333
  %382 = vmatpush.bf16.msra.mxu0 %v331
  %383 = vmatpush.bf16.msra.mxu0 %v329
  %384 = vmatpush.bf16.msra.mxu0 %v327
  %385 = vmatmul.bf16.gmra.mxu0 %v204
  %v386 = vpop.f32.mrf.mxu0
  %v387 = vadd.f32 0.0, %v386
  %v388 = vpop.f32.mrf.mxu0
  %v389 = vadd.f32 0.0, %v388
  %390 = vmatmul.bf16.gmra.mxu0 %v205
  %v391 = vpop.f32.mrf.mxu0
  %v392 = vadd.f32 0.0, %v391
  %v393 = vpop.f32.mrf.mxu0
  %v394 = vadd.f32 0.0, %v393
  %395 = vdwg.mxu0
  %v412 = vunpack.c.l.b16 %v246
  %v413 = vunpack.c.h.b16 %v246
  %v414 = vunpack.c.l.b16 %v247
  %v415 = vunpack.c.h.b16 %v247
  %v416 = vunpack.c.l.b16 %v248
  %v417 = vunpack.c.h.b16 %v248
  %v418 = vunpack.c.l.b16 %v249
  %v419 = vunpack.c.h.b16 %v249
  %v420 = vunpack.c.l.b16 %v250
  %v421 = vunpack.c.h.b16 %v250
  %v422 = vunpack.c.l.b16 %v251
  %v423 = vunpack.c.h.b16 %v251
  %v424 = vunpack.c.l.b16 %v252
  %v425 = vunpack.c.h.b16 %v252
  %v426 = vunpack.c.l.b16 %v253
  %v427 = vunpack.c.h.b16 %v253
  %v428 = vunpack.c.l.b16 %v254
  %v429 = vunpack.c.h.b16 %v254
  %v430 = vunpack.c.l.b16 %v255
  %v431 = vunpack.c.h.b16 %v255
  %v432 = vunpack.c.l.b16 %v256
  %v433 = vunpack.c.h.b16 %v256
  %v434 = vunpack.c.l.b16 %v257
  %v435 = vunpack.c.h.b16 %v257
  %v436 = vunpack.c.l.b16 %v258
  %v437 = vunpack.c.h.b16 %v258
  %v438 = vunpack.c.l.b16 %v259
  %v439 = vunpack.c.h.b16 %v259
  %v440 = vunpack.c.l.b16 %v260
  %v441 = vunpack.c.h.b16 %v260
  %v442 = vunpack.c.l.b16 %v261
  %v443 = vunpack.c.h.b16 %v261
  %v444 = vpack.c.b16 %v414, %v412
  %v445 = vpack.c.b16 %v415, %v413
  %v446 = vpack.c.b16 %v418, %v416
  %v447 = vpack.c.b16 %v419, %v417
  %v448 = vpack.c.b16 %v422, %v420
  %v449 = vpack.c.b16 %v423, %v421
  %v450 = vpack.c.b16 %v426, %v424
  %v451 = vpack.c.b16 %v427, %v425
  %v452 = vpack.c.b16 %v430, %v428
  %v453 = vpack.c.b16 %v431, %v429
  %v454 = vpack.c.b16 %v434, %v432
  %v455 = vpack.c.b16 %v435, %v433
  %v456 = vpack.c.b16 %v438, %v436
  %v457 = vpack.c.b16 %v439, %v437
  %v458 = vpack.c.b16 %v442, %v440
  %v459 = vpack.c.b16 %v443, %v441
  %476 = vmatpush.bf16.msra.mxu0 %v458
  %477 = vmatpush.bf16.msra.mxu0 %v456
  %478 = vmatpush.bf16.msra.mxu0 %v454
  %479 = vmatpush.bf16.msra.mxu0 %v452
  %480 = vmatpush.bf16.msra.mxu0 %v450
  %481 = vmatpush.bf16.msra.mxu0 %v448
  %482 = vmatpush.bf16.msra.mxu0 %v446
  %483 = vmatpush.bf16.msra.mxu0 %v444
  %484 = vmatmul.bf16.gmra.mxu0 %v163
  %v485 = vpop.f32.mrf.mxu0
  %v486 = vadd.f32 %v368, %v485
  %v487 = vpop.f32.mrf.mxu0
  %v488 = vadd.f32 %v370, %v487
  %489 = vmatmul.bf16.gmra.mxu0 %v164
  %v490 = vpop.f32.mrf.mxu0
  %v491 = vadd.f32 %v373, %v490
  %v492 = vpop.f32.mrf.mxu0
  %v493 = vadd.f32 %v375, %v492
  %494 = vdwg.mxu0
  %495 = vmatpush.bf16.msra.mxu0 %v459
  %496 = vmatpush.bf16.msra.mxu0 %v457
  %497 = vmatpush.bf16.msra.mxu0 %v455
  %498 = vmatpush.bf16.msra.mxu0 %v453
  %499 = vmatpush.bf16.msra.mxu0 %v451
  %500 = vmatpush.bf16.msra.mxu0 %v449
  %501 = vmatpush.bf16.msra.mxu0 %v447
  %502 = vmatpush.bf16.msra.mxu0 %v445
  %503 = vmatmul.bf16.gmra.mxu0 %v163
  %v504 = vpop.f32.mrf.mxu0
  %v505 = vadd.f32 %v387, %v504
  %v506 = vpop.f32.mrf.mxu0
  %v507 = vadd.f32 %v389, %v506
  %508 = vmatmul.bf16.gmra.mxu0 %v164
  %v509 = vpop.f32.mrf.mxu0
  %v510 = vadd.f32 %v392, %v509
  %v511 = vpop.f32.mrf.mxu0
  %v512 = vadd.f32 %v394, %v511
  %513 = vdwg.mxu0
  %s514 = scalar_lea.vmem %s2, 256
  %v515 = vld [vmem:[%s514] sm:$0xff]
  %v516 = vld [vmem:[%s514 + $0x8] sm:$0xff]
  %v517 = vld [vmem:[%s514 + $0x10] sm:$0xff]
  %v518 = vld [vmem:[%s514 + $0x18] sm:$0xff]
  %v519 = vld [vmem:[%s514 + $0x20] sm:$0xff]
  %v520 = vld [vmem:[%s514 + $0x28] sm:$0xff]
  %v521 = vld [vmem:[%s514 + $0x30] sm:$0xff]
  %v522 = vld [vmem:[%s514 + $0x38] sm:$0xff]
  %v523 = vld [vmem:[%s514 + $0x40] sm:$0xff]
  %v524 = vld [vmem:[%s514 + $0x48] sm:$0xff]
  %v525 = vld [vmem:[%s514 + $0x50] sm:$0xff]
  %v526 = vld [vmem:[%s514 + $0x58] sm:$0xff]
  %v527 = vld [vmem:[%s514 + $0x60] sm:$0xff]
  %v528 = vld [vmem:[%s514 + $0x68] sm:$0xff]
  %v529 = vld [vmem:[%s514 + $0x70] sm:$0xff]
  %v530 = vld [vmem:[%s514 + $0x78] sm:$0xff]
  %v547 = vunpack.c.l.b16 %v515
  %v548 = vunpack.c.h.b16 %v515
  %v549 = vunpack.c.l.b16 %v516
  %v550 = vunpack.c.h.b16 %v516
  %v551 = vunpack.c.l.b16 %v517
  %v552 = vunpack.c.h.b16 %v517
  %v553 = vunpack.c.l.b16 %v518
  %v554 = vunpack.c.h.b16 %v518
  %v555 = vunpack.c.l.b16 %v519
  %v556 = vunpack.c.h.b16 %v519
  %v557 = vunpack.c.l.b16 %v520
  %v558 = vunpack.c.h.b16 %v520
  %v559 = vunpack.c.l.b16 %v521
  %v560 = vunpack.c.h.b16 %v521
  %v561 = vunpack.c.l.b16 %v522
  %v562 = vunpack.c.h.b16 %v522
  %v563 = vunpack.c.l.b16 %v523
  %v564 = vunpack.c.h.b16 %v523
  %v565 = vunpack.c.l.b16 %v524
  %v566 = vunpack.c.h.b16 %v524
  %v567 = vunpack.c.l.b16 %v525
  %v568 = vunpack.c.h.b16 %v525
  %v569 = vunpack.c.l.b16 %v526
  %v570 = vunpack.c.h.b16 %v526
  %v571 = vunpack.c.l.b16 %v527
  %v572 = vunpack.c.h.b16 %v527
  %v573 = vunpack.c.l.b16 %v528
  %v574 = vunpack.c.h.b16 %v528
  %v575 = vunpack.c.l.b16 %v529
  %v576 = vunpack.c.h.b16 %v529
  %v577 = vunpack.c.l.b16 %v530
  %v578 = vunpack.c.h.b16 %v530
  %v579 = vpack.c.b16 %v549, %v547
  %v580 = vpack.c.b16 %v550, %v548
  %v581 = vpack.c.b16 %v553, %v551
  %v582 = vpack.c.b16 %v554, %v552
  %v583 = vpack.c.b16 %v557, %v555
  %v584 = vpack.c.b16 %v558, %v556
  %v585 = vpack.c.b16 %v561, %v559
  %v586 = vpack.c.b16 %v562, %v560
  %v587 = vpack.c.b16 %v565, %v563
  %v588 = vpack.c.b16 %v566, %v564
  %v589 = vpack.c.b16 %v569, %v567
  %v590 = vpack.c.b16 %v570, %v568
  %v591 = vpack.c.b16 %v573, %v571
  %v592 = vpack.c.b16 %v574, %v572
  %v593 = vpack.c.b16 %v577, %v575
  %v594 = vpack.c.b16 %v578, %v576
  %611 = vmatpush.bf16.msra.mxu0 %v593
  %612 = vmatpush.bf16.msra.mxu0 %v591
  %613 = vmatpush.bf16.msra.mxu0 %v589
  %614 = vmatpush.bf16.msra.mxu0 %v587
  %615 = vmatpush.bf16.msra.mxu0 %v585
  %616 = vmatpush.bf16.msra.mxu0 %v583
  %617 = vmatpush.bf16.msra.mxu0 %v581
  %618 = vmatpush.bf16.msra.mxu0 %v579
  %619 = vmatmul.bf16.gmra.mxu0 %v243
  %v620 = vpop.f32.mrf.mxu0
  %v621 = vadd.f32 0.0, %v620
  %v622 = vpop.f32.mrf.mxu0
  %v623 = vadd.f32 0.0, %v622
  %624 = vmatmul.bf16.gmra.mxu0 %v244
  %v625 = vpop.f32.mrf.mxu0
  %v626 = vadd.f32 0.0, %v625
  %v627 = vpop.f32.mrf.mxu0
  %v628 = vadd.f32 0.0, %v627
  %629 = vdwg.mxu0
  %630 = vmatpush.bf16.msra.mxu0 %v594
  %631 = vmatpush.bf16.msra.mxu0 %v592
  %632 = vmatpush.bf16.msra.mxu0 %v590
  %633 = vmatpush.bf16.msra.mxu0 %v588
  %634 = vmatpush.bf16.msra.mxu0 %v586
  %635 = vmatpush.bf16.msra.mxu0 %v584
  %636 = vmatpush.bf16.msra.mxu0 %v582
  %637 = vmatpush.bf16.msra.mxu0 %v580
  %638 = vmatmul.bf16.gmra.mxu0 %v243
  %v639 = vpop.f32.mrf.mxu0
  %v640 = vadd.f32 0.0, %v639
  %v641 = vpop.f32.mrf.mxu0
  %v642 = vadd.f32 0.0, %v641
  %643 = vmatmul.bf16.gmra.mxu0 %v244
  %v644 = vpop.f32.mrf.mxu0
  %v645 = vadd.f32 0.0, %v644
  %v646 = vpop.f32.mrf.mxu0
  %v647 = vadd.f32 0.0, %v646
  %648 = vdwg.mxu0
  %v649 = vadd.f32 %v486, %v621
  %v650 = vadd.f32 %v505, %v640
  %v651 = vadd.f32 %v488, %v623
  %v652 = vadd.f32 %v507, %v642
  %v653 = vadd.f32 %v491, %v626
  %v654 = vadd.f32 %v510, %v645
  %v655 = vadd.f32 %v493, %v628
  %v656 = vadd.f32 %v512, %v647
  %v657 = vld [vmem:[%s6] sm:$0x3]
  %v659 = vperm.slane %v657, 0
  %v660 = vperm.slane %v657, 1
  %v663 = vadd.f32 %v649, %v659
  %v664 = vadd.f32 %v650, %v660
  %v665 = vadd.f32 %v651, %v659
  %v666 = vadd.f32 %v652, %v660
  %v667 = vadd.f32 %v653, %v659
  %v668 = vadd.f32 %v654, %v660
  %v669 = vadd.f32 %v655, %v659
  %v670 = vadd.f32 %v656, %v660
  %vm671 = vcmp.gt.f32.partialorder %v663, 0.0
  %vm672 = vcmp.gt.f32.partialorder %v664, 0.0
  %vm673 = vcmp.gt.f32.partialorder %v665, 0.0
  %vm674 = vcmp.gt.f32.partialorder %v666, 0.0
  %vm675 = vcmp.gt.f32.partialorder %v667, 0.0
  %vm676 = vcmp.gt.f32.partialorder %v668, 0.0
  %vm677 = vcmp.gt.f32.partialorder %v669, 0.0
  %vm678 = vcmp.gt.f32.partialorder %v670, 0.0
  %v679 = vmul.f32 %v663, 0.25
  %v680 = vmul.f32 %v664, 0.25
  %v681 = vmul.f32 %v665, 0.25
  %v682 = vmul.f32 %v666, 0.25
  %v683 = vmul.f32 %v667, 0.25
  %v684 = vmul.f32 %v668, 0.25
  %v685 = vmul.f32 %v669, 0.25
  %v686 = vmul.f32 %v670, 0.25
  %v687 = vsel %vm671, %v663, %v679
  %v688 = vsel %vm672, %v664, %v680
  %v689 = vsel %vm673, %v665, %v681
  %v690 = vsel %vm674, %v666, %v682
  %v691 = vsel %vm675, %v667, %v683
  %v692 = vsel %vm676, %v668, %v684
  %v693 = vsel %vm677, %v669, %v685
  %v694 = vsel %vm678, %v670, %v686
  %v695 = vpack.c.bf16 %v689, %v687
  %v696 = vpack.c.bf16 %v690, %v688
  %v697 = vpack.c.bf16 %v693, %v691
  %v698 = vpack.c.bf16 %v694, %v692
  %v699 = vld [vmem:[%s3] sm:$0xf]
  %v700 = vld [vmem:[%s3 + $0x4] sm:$0xf]
  %v701 = vld [vmem:[%s3 + $0x8] sm:$0xf]
  %v702 = vld [vmem:[%s3 + $0xc] sm:$0xf]
  %v703 = vld [vmem:[%s3 + $0x10] sm:$0xf]
  %v704 = vld [vmem:[%s3 + $0x14] sm:$0xf]
  %v705 = vld [vmem:[%s3 + $0x18] sm:$0xf]
  %v706 = vld [vmem:[%s3 + $0x1c] sm:$0xf]
  %v707 = vld [vmem:[%s3 + $0x20] sm:$0xf]
  %v708 = vld [vmem:[%s3 + $0x24] sm:$0xf]
  %v709 = vld [vmem:[%s3 + $0x28] sm:$0xf]
  %v710 = vld [vmem:[%s3 + $0x2c] sm:$0xf]
  %v711 = vld [vmem:[%s3 + $0x30] sm:$0xf]
  %v712 = vld [vmem:[%s3 + $0x34] sm:$0xf]
  %v713 = vld [vmem:[%s3 + $0x38] sm:$0xf]
  %v714 = vld [vmem:[%s3 + $0x3c] sm:$0xf]
  %v715 = vld [vmem:[%s3 + $0x40] sm:$0xf]
  %v716 = vld [vmem:[%s3 + $0x44] sm:$0xf]
  %v717 = vld [vmem:[%s3 + $0x48] sm:$0xf]
  %v718 = vld [vmem:[%s3 + $0x4c] sm:$0xf]
  %v719 = vld [vmem:[%s3 + $0x50] sm:$0xf]
  %v720 = vld [vmem:[%s3 + $0x54] sm:$0xf]
  %v721 = vld [vmem:[%s3 + $0x58] sm:$0xf]
  %v722 = vld [vmem:[%s3 + $0x5c] sm:$0xf]
  %v723 = vld [vmem:[%s3 + $0x60] sm:$0xf]
  %v724 = vld [vmem:[%s3 + $0x64] sm:$0xf]
  %v725 = vld [vmem:[%s3 + $0x68] sm:$0xf]
  %v726 = vld [vmem:[%s3 + $0x6c] sm:$0xf]
  %v727 = vld [vmem:[%s3 + $0x70] sm:$0xf]
  %v728 = vld [vmem:[%s3 + $0x74] sm:$0xf]
  %v729 = vld [vmem:[%s3 + $0x78] sm:$0xf]
  %v730 = vld [vmem:[%s3 + $0x7c] sm:$0xf]
  %v731 = vld [vmem:[%s7] sm:$0x1]
  %v733 = vperm.slane %v731, 0
  %v767 = vunpack.c.l.b16 %v699
  %v768 = vunpack.c.l.b16 %v700
  %v769 = vunpack.c.l.b16 %v701
  %v770 = vunpack.c.l.b16 %v702
  %v771 = vunpack.c.l.b16 %v703
  %v772 = vunpack.c.l.b16 %v704
  %v773 = vunpack.c.l.b16 %v705
  %v774 = vunpack.c.l.b16 %v706
  %v775 = vunpack.c.l.b16 %v707
  %v776 = vunpack.c.l.b16 %v708
  %v777 = vunpack.c.l.b16 %v709
  %v778 = vunpack.c.l.b16 %v710
  %v779 = vunpack.c.l.b16 %v711
  %v780 = vunpack.c.l.b16 %v712
  %v781 = vunpack.c.l.b16 %v713
  %v782 = vunpack.c.l.b16 %v714
  %v783 = vunpack.c.l.b16 %v715
  %v784 = vunpack.c.l.b16 %v716
  %v785 = vunpack.c.l.b16 %v717
  %v786 = vunpack.c.l.b16 %v718
  %v787 = vunpack.c.l.b16 %v719
  %v788 = vunpack.c.l.b16 %v720
  %v789 = vunpack.c.l.b16 %v721
  %v790 = vunpack.c.l.b16 %v722
  %v791 = vunpack.c.l.b16 %v723
  %v792 = vunpack.c.l.b16 %v724
  %v793 = vunpack.c.l.b16 %v725
  %v794 = vunpack.c.l.b16 %v726
  %v795 = vunpack.c.l.b16 %v727
  %v796 = vunpack.c.l.b16 %v728
  %v797 = vunpack.c.l.b16 %v729
  %v798 = vunpack.c.l.b16 %v730
  %v799 = vpack.c.b16 %v768, %v767
  %v800 = vpack.c.b16 %v770, %v769
  %v801 = vpack.c.b16 %v772, %v771
  %v802 = vpack.c.b16 %v774, %v773
  %v803 = vpack.c.b16 %v776, %v775
  %v804 = vpack.c.b16 %v778, %v777
  %v805 = vpack.c.b16 %v780, %v779
  %v806 = vpack.c.b16 %v782, %v781
  %v807 = vpack.c.b16 %v784, %v783
  %v808 = vpack.c.b16 %v786, %v785
  %v809 = vpack.c.b16 %v788, %v787
  %v810 = vpack.c.b16 %v790, %v789
  %v811 = vpack.c.b16 %v792, %v791
  %v812 = vpack.c.b16 %v794, %v793
  %v813 = vpack.c.b16 %v796, %v795
  %v814 = vpack.c.b16 %v798, %v797
  %831 = vmatpush.bf16.msra.mxu0 %v806
  %832 = vmatpush.bf16.msra.mxu0 %v805
  %833 = vmatpush.bf16.msra.mxu0 %v804
  %834 = vmatpush.bf16.msra.mxu0 %v803
  %835 = vmatpush.bf16.msra.mxu0 %v802
  %836 = vmatpush.bf16.msra.mxu0 %v801
  %837 = vmatpush.bf16.msra.mxu0 %v800
  %838 = vmatpush.bf16.msra.mxu0 %v799
  %839 = vmatmul.bf16.gmra.mxu0 %v695
  %v840 = vpop.f32.mrf.mxu0
  %v841 = vadd.f32 %v733, %v840
  %v842 = vpop.f32.mrf.mxu0
  %v843 = vadd.f32 %v733, %v842
  %844 = vmatmul.bf16.gmra.mxu0 %v697
  %v845 = vpop.f32.mrf.mxu0
  %v846 = vadd.f32 %v733, %v845
  %v847 = vpop.f32.mrf.mxu0
  %v848 = vadd.f32 %v733, %v847
  %849 = vdwg.mxu0
  %850 = vmatpush.bf16.msra.mxu0 %v814
  %851 = vmatpush.bf16.msra.mxu0 %v813
  %852 = vmatpush.bf16.msra.mxu0 %v812
  %853 = vmatpush.bf16.msra.mxu0 %v811
  %854 = vmatpush.bf16.msra.mxu0 %v810
  %855 = vmatpush.bf16.msra.mxu0 %v809
  %856 = vmatpush.bf16.msra.mxu0 %v808
  %857 = vmatpush.bf16.msra.mxu0 %v807
  %858 = vmatmul.bf16.gmra.mxu0 %v696
  %v859 = vpop.f32.mrf.mxu0
  %v860 = vadd.f32 %v841, %v859
  %v861 = vpop.f32.mrf.mxu0
  %v862 = vadd.f32 %v843, %v861
  %863 = vmatmul.bf16.gmra.mxu0 %v698
  %v864 = vpop.f32.mrf.mxu0
  %v865 = vadd.f32 %v846, %v864
  %v866 = vpop.f32.mrf.mxu0
  %v867 = vadd.f32 %v848, %v866
  %868 = vdwg.mxu0
  %vm869 = vcmp.gt.f32.partialorder %v860, 0.0
  %vm870 = vcmp.gt.f32.partialorder %v862, 0.0
  %vm871 = vcmp.gt.f32.partialorder %v865, 0.0
  %vm872 = vcmp.gt.f32.partialorder %v867, 0.0
  %v873 = vmul.f32 %v860, 0.25
  %v874 = vmul.f32 %v862, 0.25
  %v875 = vmul.f32 %v865, 0.25
  %v876 = vmul.f32 %v867, 0.25
  %v877 = vsel %vm869, %v860, %v873
  %v878 = vsel %vm870, %v862, %v874
  %v879 = vsel %vm871, %v865, %v875
  %v880 = vsel %vm872, %v867, %v876
  %v881 = vpack.c.bf16 %v878, %v877
  %v882 = vpack.c.bf16 %v880, %v879
  %v883 = vrot.slane %v877, 7
  %v884 = vrot.slane %v878, 7
  %v885 = vrot.slane %v879, 7
  %v886 = vrot.slane %v880, 7
  %v887 = vsel %vm171, %v885, %v886
  %v888 = vsel %vm171, %v884, %v885
  %v889 = vsel %vm171, %v883, %v884
  %v890 = vsel %vm171, %v886, %v883
  %v891 = vmul.f32 %v890, %v183
  %v892 = vmul.f32 %v889, %v188
  %v893 = vmul.f32 %v888, %v193
  %v894 = vmul.f32 %v887, %v198
  %v895 = vpack.c.bf16 %v892, %v891
  %v896 = vpack.c.bf16 %v894, %v893
  %v897 = vrot.slane %v877, 1
  %v898 = vrot.slane %v878, 1
  %v899 = vrot.slane %v879, 1
  %v900 = vrot.slane %v880, 1
  %v901 = vsel %vm210, %v899, %v900
  %v902 = vsel %vm210, %v898, %v899
  %v903 = vsel %vm210, %v897, %v898
  %v904 = vsel %vm210, %v900, %v897
  %v905 = vmul.f32 %v903, %v222
  %v906 = vmul.f32 %v902, %v227
  %v907 = vmul.f32 %v901, %v232
  %v908 = vmul.f32 %v904, %v237
  %v909 = vpack.c.bf16 %v906, %v905
  %v910 = vpack.c.bf16 %v908, %v907
  %s911 = scalar_lea.vmem %s4, 128
  %v912 = vld [vmem:[%s911] sm:$0xff]
  %v913 = vld [vmem:[%s911 + $0x8] sm:$0xff]
  %v914 = vld [vmem:[%s911 + $0x10] sm:$0xff]
  %v915 = vld [vmem:[%s911 + $0x18] sm:$0xff]
  %v916 = vld [vmem:[%s911 + $0x20] sm:$0xff]
  %v917 = vld [vmem:[%s911 + $0x28] sm:$0xff]
  %v918 = vld [vmem:[%s911 + $0x30] sm:$0xff]
  %v919 = vld [vmem:[%s911 + $0x38] sm:$0xff]
  %v920 = vld [vmem:[%s911 + $0x40] sm:$0xff]
  %v921 = vld [vmem:[%s911 + $0x48] sm:$0xff]
  %v922 = vld [vmem:[%s911 + $0x50] sm:$0xff]
  %v923 = vld [vmem:[%s911 + $0x58] sm:$0xff]
  %v924 = vld [vmem:[%s911 + $0x60] sm:$0xff]
  %v925 = vld [vmem:[%s911 + $0x68] sm:$0xff]
  %v926 = vld [vmem:[%s911 + $0x70] sm:$0xff]
  %v927 = vld [vmem:[%s911 + $0x78] sm:$0xff]
  %v928 = vld [vmem:[%s4] sm:$0xff]
  %v929 = vld [vmem:[%s4 + $0x8] sm:$0xff]
  %v930 = vld [vmem:[%s4 + $0x10] sm:$0xff]
  %v931 = vld [vmem:[%s4 + $0x18] sm:$0xff]
  %v932 = vld [vmem:[%s4 + $0x20] sm:$0xff]
  %v933 = vld [vmem:[%s4 + $0x28] sm:$0xff]
  %v934 = vld [vmem:[%s4 + $0x30] sm:$0xff]
  %v935 = vld [vmem:[%s4 + $0x38] sm:$0xff]
  %v936 = vld [vmem:[%s4 + $0x40] sm:$0xff]
  %v937 = vld [vmem:[%s4 + $0x48] sm:$0xff]
  %v938 = vld [vmem:[%s4 + $0x50] sm:$0xff]
  %v939 = vld [vmem:[%s4 + $0x58] sm:$0xff]
  %v940 = vld [vmem:[%s4 + $0x60] sm:$0xff]
  %v941 = vld [vmem:[%s4 + $0x68] sm:$0xff]
  %v942 = vld [vmem:[%s4 + $0x70] sm:$0xff]
  %v943 = vld [vmem:[%s4 + $0x78] sm:$0xff]
  %v960 = vunpack.c.l.b16 %v928
  %v961 = vunpack.c.h.b16 %v928
  %v962 = vunpack.c.l.b16 %v929
  %v963 = vunpack.c.h.b16 %v929
  %v964 = vunpack.c.l.b16 %v930
  %v965 = vunpack.c.h.b16 %v930
  %v966 = vunpack.c.l.b16 %v931
  %v967 = vunpack.c.h.b16 %v931
  %v968 = vunpack.c.l.b16 %v932
  %v969 = vunpack.c.h.b16 %v932
  %v970 = vunpack.c.l.b16 %v933
  %v971 = vunpack.c.h.b16 %v933
  %v972 = vunpack.c.l.b16 %v934
  %v973 = vunpack.c.h.b16 %v934
  %v974 = vunpack.c.l.b16 %v935
  %v975 = vunpack.c.h.b16 %v935
  %v976 = vunpack.c.l.b16 %v936
  %v977 = vunpack.c.h.b16 %v936
  %v978 = vunpack.c.l.b16 %v937
  %v979 = vunpack.c.h.b16 %v937
  %v980 = vunpack.c.l.b16 %v938
  %v981 = vunpack.c.h.b16 %v938
  %v982 = vunpack.c.l.b16 %v939
  %v983 = vunpack.c.h.b16 %v939
  %v984 = vunpack.c.l.b16 %v940
  %v985 = vunpack.c.h.b16 %v940
  %v986 = vunpack.c.l.b16 %v941
  %v987 = vunpack.c.h.b16 %v941
  %v988 = vunpack.c.l.b16 %v942
  %v989 = vunpack.c.h.b16 %v942
  %v990 = vunpack.c.l.b16 %v943
  %v991 = vunpack.c.h.b16 %v943
  %v992 = vpack.c.b16 %v962, %v960
  %v993 = vpack.c.b16 %v963, %v961
  %v994 = vpack.c.b16 %v966, %v964
  %v995 = vpack.c.b16 %v967, %v965
  %v996 = vpack.c.b16 %v970, %v968
  %v997 = vpack.c.b16 %v971, %v969
  %v998 = vpack.c.b16 %v974, %v972
  %v999 = vpack.c.b16 %v975, %v973
  %v1000 = vpack.c.b16 %v978, %v976
  %v1001 = vpack.c.b16 %v979, %v977
  %v1002 = vpack.c.b16 %v982, %v980
  %v1003 = vpack.c.b16 %v983, %v981
  %v1004 = vpack.c.b16 %v986, %v984
  %v1005 = vpack.c.b16 %v987, %v985
  %v1006 = vpack.c.b16 %v990, %v988
  %v1007 = vpack.c.b16 %v991, %v989
  %1024 = vmatpush.bf16.msra.mxu0 %v1006
  %1025 = vmatpush.bf16.msra.mxu0 %v1004
  %1026 = vmatpush.bf16.msra.mxu0 %v1002
  %1027 = vmatpush.bf16.msra.mxu0 %v1000
  %1028 = vmatpush.bf16.msra.mxu0 %v998
  %1029 = vmatpush.bf16.msra.mxu0 %v996
  %1030 = vmatpush.bf16.msra.mxu0 %v994
  %1031 = vmatpush.bf16.msra.mxu0 %v992
  %1032 = vmatmul.bf16.gmra.mxu0 %v895
  %v1033 = vpop.f32.mrf.mxu0
  %v1034 = vadd.f32 0.0, %v1033
  %v1035 = vpop.f32.mrf.mxu0
  %v1036 = vadd.f32 0.0, %v1035
  %1037 = vmatmul.bf16.gmra.mxu0 %v896
  %v1038 = vpop.f32.mrf.mxu0
  %v1039 = vadd.f32 0.0, %v1038
  %v1040 = vpop.f32.mrf.mxu0
  %v1041 = vadd.f32 0.0, %v1040
  %1042 = vdwg.mxu0
  %1043 = vmatpush.bf16.msra.mxu0 %v1007
  %1044 = vmatpush.bf16.msra.mxu0 %v1005
  %1045 = vmatpush.bf16.msra.mxu0 %v1003
  %1046 = vmatpush.bf16.msra.mxu0 %v1001
  %1047 = vmatpush.bf16.msra.mxu0 %v999
  %1048 = vmatpush.bf16.msra.mxu0 %v997
  %1049 = vmatpush.bf16.msra.mxu0 %v995
  %1050 = vmatpush.bf16.msra.mxu0 %v993
  %1051 = vmatmul.bf16.gmra.mxu0 %v895
  %v1052 = vpop.f32.mrf.mxu0
  %v1053 = vadd.f32 0.0, %v1052
  %v1054 = vpop.f32.mrf.mxu0
  %v1055 = vadd.f32 0.0, %v1054
  %1056 = vmatmul.bf16.gmra.mxu0 %v896
  %v1057 = vpop.f32.mrf.mxu0
  %v1058 = vadd.f32 0.0, %v1057
  %v1059 = vpop.f32.mrf.mxu0
  %v1060 = vadd.f32 0.0, %v1059
  %1061 = vdwg.mxu0
  %v1078 = vunpack.c.l.b16 %v912
  %v1079 = vunpack.c.h.b16 %v912
  %v1080 = vunpack.c.l.b16 %v913
  %v1081 = vunpack.c.h.b16 %v913
  %v1082 = vunpack.c.l.b16 %v914
  %v1083 = vunpack.c.h.b16 %v914
  %v1084 = vunpack.c.l.b16 %v915
  %v1085 = vunpack.c.h.b16 %v915
  %v1086 = vunpack.c.l.b16 %v916
  %v1087 = vunpack.c.h.b16 %v916
  %v1088 = vunpack.c.l.b16 %v917
  %v1089 = vunpack.c.h.b16 %v917
  %v1090 = vunpack.c.l.b16 %v918
  %v1091 = vunpack.c.h.b16 %v918
  %v1092 = vunpack.c.l.b16 %v919
  %v1093 = vunpack.c.h.b16 %v919
  %v1094 = vunpack.c.l.b16 %v920
  %v1095 = vunpack.c.h.b16 %v920
  %v1096 = vunpack.c.l.b16 %v921
  %v1097 = vunpack.c.h.b16 %v921
  %v1098 = vunpack.c.l.b16 %v922
  %v1099 = vunpack.c.h.b16 %v922
  %v1100 = vunpack.c.l.b16 %v923
  %v1101 = vunpack.c.h.b16 %v923
  %v1102 = vunpack.c.l.b16 %v924
  %v1103 = vunpack.c.h.b16 %v924
  %v1104 = vunpack.c.l.b16 %v925
  %v1105 = vunpack.c.h.b16 %v925
  %v1106 = vunpack.c.l.b16 %v926
  %v1107 = vunpack.c.h.b16 %v926
  %v1108 = vunpack.c.l.b16 %v927
  %v1109 = vunpack.c.h.b16 %v927
  %v1110 = vpack.c.b16 %v1080, %v1078
  %v1111 = vpack.c.b16 %v1081, %v1079
  %v1112 = vpack.c.b16 %v1084, %v1082
  %v1113 = vpack.c.b16 %v1085, %v1083
  %v1114 = vpack.c.b16 %v1088, %v1086
  %v1115 = vpack.c.b16 %v1089, %v1087
  %v1116 = vpack.c.b16 %v1092, %v1090
  %v1117 = vpack.c.b16 %v1093, %v1091
  %v1118 = vpack.c.b16 %v1096, %v1094
  %v1119 = vpack.c.b16 %v1097, %v1095
  %v1120 = vpack.c.b16 %v1100, %v1098
  %v1121 = vpack.c.b16 %v1101, %v1099
  %v1122 = vpack.c.b16 %v1104, %v1102
  %v1123 = vpack.c.b16 %v1105, %v1103
  %v1124 = vpack.c.b16 %v1108, %v1106
  %v1125 = vpack.c.b16 %v1109, %v1107
  %1142 = vmatpush.bf16.msra.mxu0 %v1124
  %1143 = vmatpush.bf16.msra.mxu0 %v1122
  %1144 = vmatpush.bf16.msra.mxu0 %v1120
  %1145 = vmatpush.bf16.msra.mxu0 %v1118
  %1146 = vmatpush.bf16.msra.mxu0 %v1116
  %1147 = vmatpush.bf16.msra.mxu0 %v1114
  %1148 = vmatpush.bf16.msra.mxu0 %v1112
  %1149 = vmatpush.bf16.msra.mxu0 %v1110
  %1150 = vmatmul.bf16.gmra.mxu0 %v881
  %v1151 = vpop.f32.mrf.mxu0
  %v1152 = vadd.f32 %v1034, %v1151
  %v1153 = vpop.f32.mrf.mxu0
  %v1154 = vadd.f32 %v1036, %v1153
  %1155 = vmatmul.bf16.gmra.mxu0 %v882
  %v1156 = vpop.f32.mrf.mxu0
  %v1157 = vadd.f32 %v1039, %v1156
  %v1158 = vpop.f32.mrf.mxu0
  %v1159 = vadd.f32 %v1041, %v1158
  %1160 = vdwg.mxu0
  %1161 = vmatpush.bf16.msra.mxu0 %v1125
  %1162 = vmatpush.bf16.msra.mxu0 %v1123
  %1163 = vmatpush.bf16.msra.mxu0 %v1121
  %1164 = vmatpush.bf16.msra.mxu0 %v1119
  %1165 = vmatpush.bf16.msra.mxu0 %v1117
  %1166 = vmatpush.bf16.msra.mxu0 %v1115
  %1167 = vmatpush.bf16.msra.mxu0 %v1113
  %1168 = vmatpush.bf16.msra.mxu0 %v1111
  %1169 = vmatmul.bf16.gmra.mxu0 %v881
  %v1170 = vpop.f32.mrf.mxu0
  %v1171 = vadd.f32 %v1053, %v1170
  %v1172 = vpop.f32.mrf.mxu0
  %v1173 = vadd.f32 %v1055, %v1172
  %1174 = vmatmul.bf16.gmra.mxu0 %v882
  %v1175 = vpop.f32.mrf.mxu0
  %v1176 = vadd.f32 %v1058, %v1175
  %v1177 = vpop.f32.mrf.mxu0
  %v1178 = vadd.f32 %v1060, %v1177
  %1179 = vdwg.mxu0
  %s1180 = scalar_lea.vmem %s4, 256
  %v1181 = vld [vmem:[%s1180] sm:$0xff]
  %v1182 = vld [vmem:[%s1180 + $0x8] sm:$0xff]
  %v1183 = vld [vmem:[%s1180 + $0x10] sm:$0xff]
  %v1184 = vld [vmem:[%s1180 + $0x18] sm:$0xff]
  %v1185 = vld [vmem:[%s1180 + $0x20] sm:$0xff]
  %v1186 = vld [vmem:[%s1180 + $0x28] sm:$0xff]
  %v1187 = vld [vmem:[%s1180 + $0x30] sm:$0xff]
  %v1188 = vld [vmem:[%s1180 + $0x38] sm:$0xff]
  %v1189 = vld [vmem:[%s1180 + $0x40] sm:$0xff]
  %v1190 = vld [vmem:[%s1180 + $0x48] sm:$0xff]
  %v1191 = vld [vmem:[%s1180 + $0x50] sm:$0xff]
  %v1192 = vld [vmem:[%s1180 + $0x58] sm:$0xff]
  %v1193 = vld [vmem:[%s1180 + $0x60] sm:$0xff]
  %v1194 = vld [vmem:[%s1180 + $0x68] sm:$0xff]
  %v1195 = vld [vmem:[%s1180 + $0x70] sm:$0xff]
  %v1196 = vld [vmem:[%s1180 + $0x78] sm:$0xff]
  %v1213 = vunpack.c.l.b16 %v1181
  %v1214 = vunpack.c.h.b16 %v1181
  %v1215 = vunpack.c.l.b16 %v1182
  %v1216 = vunpack.c.h.b16 %v1182
  %v1217 = vunpack.c.l.b16 %v1183
  %v1218 = vunpack.c.h.b16 %v1183
  %v1219 = vunpack.c.l.b16 %v1184
  %v1220 = vunpack.c.h.b16 %v1184
  %v1221 = vunpack.c.l.b16 %v1185
  %v1222 = vunpack.c.h.b16 %v1185
  %v1223 = vunpack.c.l.b16 %v1186
  %v1224 = vunpack.c.h.b16 %v1186
  %v1225 = vunpack.c.l.b16 %v1187
  %v1226 = vunpack.c.h.b16 %v1187
  %v1227 = vunpack.c.l.b16 %v1188
  %v1228 = vunpack.c.h.b16 %v1188
  %v1229 = vunpack.c.l.b16 %v1189
  %v1230 = vunpack.c.h.b16 %v1189
  %v1231 = vunpack.c.l.b16 %v1190
  %v1232 = vunpack.c.h.b16 %v1190
  %v1233 = vunpack.c.l.b16 %v1191
  %v1234 = vunpack.c.h.b16 %v1191
  %v1235 = vunpack.c.l.b16 %v1192
  %v1236 = vunpack.c.h.b16 %v1192
  %v1237 = vunpack.c.l.b16 %v1193
  %v1238 = vunpack.c.h.b16 %v1193
  %v1239 = vunpack.c.l.b16 %v1194
  %v1240 = vunpack.c.h.b16 %v1194
  %v1241 = vunpack.c.l.b16 %v1195
  %v1242 = vunpack.c.h.b16 %v1195
  %v1243 = vunpack.c.l.b16 %v1196
  %v1244 = vunpack.c.h.b16 %v1196
  %v1245 = vpack.c.b16 %v1215, %v1213
  %v1246 = vpack.c.b16 %v1216, %v1214
  %v1247 = vpack.c.b16 %v1219, %v1217
  %v1248 = vpack.c.b16 %v1220, %v1218
  %v1249 = vpack.c.b16 %v1223, %v1221
  %v1250 = vpack.c.b16 %v1224, %v1222
  %v1251 = vpack.c.b16 %v1227, %v1225
  %v1252 = vpack.c.b16 %v1228, %v1226
  %v1253 = vpack.c.b16 %v1231, %v1229
  %v1254 = vpack.c.b16 %v1232, %v1230
  %v1255 = vpack.c.b16 %v1235, %v1233
  %v1256 = vpack.c.b16 %v1236, %v1234
  %v1257 = vpack.c.b16 %v1239, %v1237
  %v1258 = vpack.c.b16 %v1240, %v1238
  %v1259 = vpack.c.b16 %v1243, %v1241
  %v1260 = vpack.c.b16 %v1244, %v1242
  %1277 = vmatpush.bf16.msra.mxu0 %v1259
  %1278 = vmatpush.bf16.msra.mxu0 %v1257
  %1279 = vmatpush.bf16.msra.mxu0 %v1255
  %1280 = vmatpush.bf16.msra.mxu0 %v1253
  %1281 = vmatpush.bf16.msra.mxu0 %v1251
  %1282 = vmatpush.bf16.msra.mxu0 %v1249
  %1283 = vmatpush.bf16.msra.mxu0 %v1247
  %1284 = vmatpush.bf16.msra.mxu0 %v1245
  %1285 = vmatmul.bf16.gmra.mxu0 %v909
  %v1286 = vpop.f32.mrf.mxu0
  %v1287 = vadd.f32 0.0, %v1286
  %v1288 = vpop.f32.mrf.mxu0
  %v1289 = vadd.f32 0.0, %v1288
  %1290 = vmatmul.bf16.gmra.mxu0 %v910
  %v1291 = vpop.f32.mrf.mxu0
  %v1292 = vadd.f32 0.0, %v1291
  %v1293 = vpop.f32.mrf.mxu0
  %v1294 = vadd.f32 0.0, %v1293
  %1295 = vdwg.mxu0
  %1296 = vmatpush.bf16.msra.mxu0 %v1260
  %1297 = vmatpush.bf16.msra.mxu0 %v1258
  %1298 = vmatpush.bf16.msra.mxu0 %v1256
  %1299 = vmatpush.bf16.msra.mxu0 %v1254
  %1300 = vmatpush.bf16.msra.mxu0 %v1252
  %1301 = vmatpush.bf16.msra.mxu0 %v1250
  %1302 = vmatpush.bf16.msra.mxu0 %v1248
  %1303 = vmatpush.bf16.msra.mxu0 %v1246
  %1304 = vmatmul.bf16.gmra.mxu0 %v909
  %v1305 = vpop.f32.mrf.mxu0
  %v1306 = vadd.f32 0.0, %v1305
  %v1307 = vpop.f32.mrf.mxu0
  %v1308 = vadd.f32 0.0, %v1307
  %1309 = vmatmul.bf16.gmra.mxu0 %v910
  %v1310 = vpop.f32.mrf.mxu0
  %v1311 = vadd.f32 0.0, %v1310
  %v1312 = vpop.f32.mrf.mxu0
  %v1313 = vadd.f32 0.0, %v1312
  %1314 = vdwg.mxu0
  %v1315 = vadd.f32 %v1152, %v1287
  %v1316 = vadd.f32 %v1171, %v1306
  %v1317 = vadd.f32 %v1154, %v1289
  %v1318 = vadd.f32 %v1173, %v1308
  %v1319 = vadd.f32 %v1157, %v1292
  %v1320 = vadd.f32 %v1176, %v1311
  %v1321 = vadd.f32 %v1159, %v1294
  %v1322 = vadd.f32 %v1178, %v1313
  %v1323 = vld [vmem:[%s8] sm:$0x3]
  %v1325 = vperm.slane %v1323, 0
  %v1326 = vperm.slane %v1323, 1
  %v1329 = vadd.f32 %v1315, %v1325
  %v1330 = vadd.f32 %v1316, %v1326
  %v1331 = vadd.f32 %v1317, %v1325
  %v1332 = vadd.f32 %v1318, %v1326
  %v1333 = vadd.f32 %v1319, %v1325
  %v1334 = vadd.f32 %v1320, %v1326
  %v1335 = vadd.f32 %v1321, %v1325
  %v1336 = vadd.f32 %v1322, %v1326
  %vm1337 = vcmp.gt.f32.partialorder %v1329, 0.0
  %vm1338 = vcmp.gt.f32.partialorder %v1330, 0.0
  %vm1339 = vcmp.gt.f32.partialorder %v1331, 0.0
  %vm1340 = vcmp.gt.f32.partialorder %v1332, 0.0
  %vm1341 = vcmp.gt.f32.partialorder %v1333, 0.0
  %vm1342 = vcmp.gt.f32.partialorder %v1334, 0.0
  %vm1343 = vcmp.gt.f32.partialorder %v1335, 0.0
  %vm1344 = vcmp.gt.f32.partialorder %v1336, 0.0
  %v1345 = vmul.f32 %v1329, 0.25
  %v1346 = vmul.f32 %v1330, 0.25
  %v1347 = vmul.f32 %v1331, 0.25
  %v1348 = vmul.f32 %v1332, 0.25
  %v1349 = vmul.f32 %v1333, 0.25
  %v1350 = vmul.f32 %v1334, 0.25
  %v1351 = vmul.f32 %v1335, 0.25
  %v1352 = vmul.f32 %v1336, 0.25
  %v1353 = vsel %vm1337, %v1329, %v1345
  %v1354 = vsel %vm1338, %v1330, %v1346
  %v1355 = vsel %vm1339, %v1331, %v1347
  %v1356 = vsel %vm1340, %v1332, %v1348
  %v1357 = vsel %vm1341, %v1333, %v1349
  %v1358 = vsel %vm1342, %v1334, %v1350
  %v1359 = vsel %vm1343, %v1335, %v1351
  %v1360 = vsel %vm1344, %v1336, %v1352
  %v1361 = vpack.c.bf16 %v1355, %v1353
  %v1362 = vpack.c.bf16 %v1356, %v1354
  %v1363 = vpack.c.bf16 %v1359, %v1357
  %v1364 = vpack.c.bf16 %v1360, %v1358
  %v1365 = vld [vmem:[%s11] sm:$0xf]
  %v1366 = vld [vmem:[%s11 + $0x4] sm:$0xf]
  %v1367 = vld [vmem:[%s11 + $0x8] sm:$0xf]
  %v1368 = vld [vmem:[%s11 + $0xc] sm:$0xf]
  %v1369 = vld [vmem:[%s11 + $0x10] sm:$0xf]
  %v1370 = vld [vmem:[%s11 + $0x14] sm:$0xf]
  %v1371 = vld [vmem:[%s11 + $0x18] sm:$0xf]
  %v1372 = vld [vmem:[%s11 + $0x1c] sm:$0xf]
  %v1373 = vld [vmem:[%s11 + $0x20] sm:$0xf]
  %v1374 = vld [vmem:[%s11 + $0x24] sm:$0xf]
  %v1375 = vld [vmem:[%s11 + $0x28] sm:$0xf]
  %v1376 = vld [vmem:[%s11 + $0x2c] sm:$0xf]
  %v1377 = vld [vmem:[%s11 + $0x30] sm:$0xf]
  %v1378 = vld [vmem:[%s11 + $0x34] sm:$0xf]
  %v1379 = vld [vmem:[%s11 + $0x38] sm:$0xf]
  %v1380 = vld [vmem:[%s11 + $0x3c] sm:$0xf]
  %v1381 = vld [vmem:[%s11 + $0x40] sm:$0xf]
  %v1382 = vld [vmem:[%s11 + $0x44] sm:$0xf]
  %v1383 = vld [vmem:[%s11 + $0x48] sm:$0xf]
  %v1384 = vld [vmem:[%s11 + $0x4c] sm:$0xf]
  %v1385 = vld [vmem:[%s11 + $0x50] sm:$0xf]
  %v1386 = vld [vmem:[%s11 + $0x54] sm:$0xf]
  %v1387 = vld [vmem:[%s11 + $0x58] sm:$0xf]
  %v1388 = vld [vmem:[%s11 + $0x5c] sm:$0xf]
  %v1389 = vld [vmem:[%s11 + $0x60] sm:$0xf]
  %v1390 = vld [vmem:[%s11 + $0x64] sm:$0xf]
  %v1391 = vld [vmem:[%s11 + $0x68] sm:$0xf]
  %v1392 = vld [vmem:[%s11 + $0x6c] sm:$0xf]
  %v1393 = vld [vmem:[%s11 + $0x70] sm:$0xf]
  %v1394 = vld [vmem:[%s11 + $0x74] sm:$0xf]
  %v1395 = vld [vmem:[%s11 + $0x78] sm:$0xf]
  %v1396 = vld [vmem:[%s11 + $0x7c] sm:$0xf]
  %v1429 = vunpack.c.l.b16 %v1365
  %v1430 = vunpack.c.l.b16 %v1366
  %v1431 = vunpack.c.l.b16 %v1367
  %v1432 = vunpack.c.l.b16 %v1368
  %v1433 = vunpack.c.l.b16 %v1369
  %v1434 = vunpack.c.l.b16 %v1370
  %v1435 = vunpack.c.l.b16 %v1371
  %v1436 = vunpack.c.l.b16 %v1372
  %v1437 = vunpack.c.l.b16 %v1373
  %v1438 = vunpack.c.l.b16 %v1374
  %v1439 = vunpack.c.l.b16 %v1375
  %v1440 = vunpack.c.l.b16 %v1376
  %v1441 = vunpack.c.l.b16 %v1377
  %v1442 = vunpack.c.l.b16 %v1378
  %v1443 = vunpack.c.l.b16 %v1379
  %v1444 = vunpack.c.l.b16 %v1380
  %v1445 = vunpack.c.l.b16 %v1381
  %v1446 = vunpack.c.l.b16 %v1382
  %v1447 = vunpack.c.l.b16 %v1383
  %v1448 = vunpack.c.l.b16 %v1384
  %v1449 = vunpack.c.l.b16 %v1385
  %v1450 = vunpack.c.l.b16 %v1386
  %v1451 = vunpack.c.l.b16 %v1387
  %v1452 = vunpack.c.l.b16 %v1388
  %v1453 = vunpack.c.l.b16 %v1389
  %v1454 = vunpack.c.l.b16 %v1390
  %v1455 = vunpack.c.l.b16 %v1391
  %v1456 = vunpack.c.l.b16 %v1392
  %v1457 = vunpack.c.l.b16 %v1393
  %v1458 = vunpack.c.l.b16 %v1394
  %v1459 = vunpack.c.l.b16 %v1395
  %v1460 = vunpack.c.l.b16 %v1396
  %v1461 = vpack.c.b16 %v1430, %v1429
  %v1462 = vpack.c.b16 %v1432, %v1431
  %v1463 = vpack.c.b16 %v1434, %v1433
  %v1464 = vpack.c.b16 %v1436, %v1435
  %v1465 = vpack.c.b16 %v1438, %v1437
  %v1466 = vpack.c.b16 %v1440, %v1439
  %v1467 = vpack.c.b16 %v1442, %v1441
  %v1468 = vpack.c.b16 %v1444, %v1443
  %v1469 = vpack.c.b16 %v1446, %v1445
  %v1470 = vpack.c.b16 %v1448, %v1447
  %v1471 = vpack.c.b16 %v1450, %v1449
  %v1472 = vpack.c.b16 %v1452, %v1451
  %v1473 = vpack.c.b16 %v1454, %v1453
  %v1474 = vpack.c.b16 %v1456, %v1455
  %v1475 = vpack.c.b16 %v1458, %v1457
  %v1476 = vpack.c.b16 %v1460, %v1459
  %1493 = vmatpush.bf16.msra.mxu0 %v1468
  %1494 = vmatpush.bf16.msra.mxu0 %v1467
  %1495 = vmatpush.bf16.msra.mxu0 %v1466
  %1496 = vmatpush.bf16.msra.mxu0 %v1465
  %1497 = vmatpush.bf16.msra.mxu0 %v1464
  %1498 = vmatpush.bf16.msra.mxu0 %v1463
  %1499 = vmatpush.bf16.msra.mxu0 %v1462
  %1500 = vmatpush.bf16.msra.mxu0 %v1461
  %1501 = vmatmul.bf16.gmra.mxu0 %v1361
  %v1502 = vpop.f32.mrf.mxu0
  %v1503 = vadd.f32 0.0, %v1502
  %v1504 = vpop.f32.mrf.mxu0
  %v1505 = vadd.f32 0.0, %v1504
  %1506 = vmatmul.bf16.gmra.mxu0 %v1363
  %v1507 = vpop.f32.mrf.mxu0
  %v1508 = vadd.f32 0.0, %v1507
  %v1509 = vpop.f32.mrf.mxu0
  %v1510 = vadd.f32 0.0, %v1509
  %1511 = vdwg.mxu0
  %1512 = vmatpush.bf16.msra.mxu0 %v1476
  %1513 = vmatpush.bf16.msra.mxu0 %v1475
  %1514 = vmatpush.bf16.msra.mxu0 %v1474
  %1515 = vmatpush.bf16.msra.mxu0 %v1473
  %1516 = vmatpush.bf16.msra.mxu0 %v1472
  %1517 = vmatpush.bf16.msra.mxu0 %v1471
  %1518 = vmatpush.bf16.msra.mxu0 %v1470
  %1519 = vmatpush.bf16.msra.mxu0 %v1469
  %1520 = vmatmul.bf16.gmra.mxu0 %v1362
  %v1521 = vpop.f32.mrf.mxu0
  %v1522 = vadd.f32 %v1503, %v1521
  %v1523 = vpop.f32.mrf.mxu0
  %v1524 = vadd.f32 %v1505, %v1523
  %1525 = vmatmul.bf16.gmra.mxu0 %v1364
  %v1526 = vpop.f32.mrf.mxu0
  %v1527 = vadd.f32 %v1508, %v1526
  %v1528 = vpop.f32.mrf.mxu0
  %v1529 = vadd.f32 %v1510, %v1528
  %1530 = vdwg.mxu0
  %v1531 = vld [vmem:[%s12] sm:$0xf]
  %v1532 = vld [vmem:[%s12 + $0x4] sm:$0xf]
  %v1533 = vld [vmem:[%s12 + $0x8] sm:$0xf]
  %v1534 = vld [vmem:[%s12 + $0xc] sm:$0xf]
  %v1535 = vld [vmem:[%s12 + $0x10] sm:$0xf]
  %v1536 = vld [vmem:[%s12 + $0x14] sm:$0xf]
  %v1537 = vld [vmem:[%s12 + $0x18] sm:$0xf]
  %v1538 = vld [vmem:[%s12 + $0x1c] sm:$0xf]
  %v1539 = vld [vmem:[%s12 + $0x20] sm:$0xf]
  %v1540 = vld [vmem:[%s12 + $0x24] sm:$0xf]
  %v1541 = vld [vmem:[%s12 + $0x28] sm:$0xf]
  %v1542 = vld [vmem:[%s12 + $0x2c] sm:$0xf]
  %v1543 = vld [vmem:[%s12 + $0x30] sm:$0xf]
  %v1544 = vld [vmem:[%s12 + $0x34] sm:$0xf]
  %v1545 = vld [vmem:[%s12 + $0x38] sm:$0xf]
  %v1546 = vld [vmem:[%s12 + $0x3c] sm:$0xf]
  %v1547 = vld [vmem:[%s12 + $0x40] sm:$0xf]
  %v1548 = vld [vmem:[%s12 + $0x44] sm:$0xf]
  %v1549 = vld [vmem:[%s12 + $0x48] sm:$0xf]
  %v1550 = vld [vmem:[%s12 + $0x4c] sm:$0xf]
  %v1551 = vld [vmem:[%s12 + $0x50] sm:$0xf]
  %v1552 = vld [vmem:[%s12 + $0x54] sm:$0xf]
  %v1553 = vld [vmem:[%s12 + $0x58] sm:$0xf]
  %v1554 = vld [vmem:[%s12 + $0x5c] sm:$0xf]
  %v1555 = vld [vmem:[%s12 + $0x60] sm:$0xf]
  %v1556 = vld [vmem:[%s12 + $0x64] sm:$0xf]
  %v1557 = vld [vmem:[%s12 + $0x68] sm:$0xf]
  %v1558 = vld [vmem:[%s12 + $0x6c] sm:$0xf]
  %v1559 = vld [vmem:[%s12 + $0x70] sm:$0xf]
  %v1560 = vld [vmem:[%s12 + $0x74] sm:$0xf]
  %v1561 = vld [vmem:[%s12 + $0x78] sm:$0xf]
  %v1562 = vld [vmem:[%s12 + $0x7c] sm:$0xf]
  %v1595 = vunpack.c.l.b16 %v1531
  %v1596 = vunpack.c.l.b16 %v1532
  %v1597 = vunpack.c.l.b16 %v1533
  %v1598 = vunpack.c.l.b16 %v1534
  %v1599 = vunpack.c.l.b16 %v1535
  %v1600 = vunpack.c.l.b16 %v1536
  %v1601 = vunpack.c.l.b16 %v1537
  %v1602 = vunpack.c.l.b16 %v1538
  %v1603 = vunpack.c.l.b16 %v1539
  %v1604 = vunpack.c.l.b16 %v1540
  %v1605 = vunpack.c.l.b16 %v1541
  %v1606 = vunpack.c.l.b16 %v1542
  %v1607 = vunpack.c.l.b16 %v1543
  %v1608 = vunpack.c.l.b16 %v1544
  %v1609 = vunpack.c.l.b16 %v1545
  %v1610 = vunpack.c.l.b16 %v1546
  %v1611 = vunpack.c.l.b16 %v1547
  %v1612 = vunpack.c.l.b16 %v1548
  %v1613 = vunpack.c.l.b16 %v1549
  %v1614 = vunpack.c.l.b16 %v1550
  %v1615 = vunpack.c.l.b16 %v1551
  %v1616 = vunpack.c.l.b16 %v1552
  %v1617 = vunpack.c.l.b16 %v1553
  %v1618 = vunpack.c.l.b16 %v1554
  %v1619 = vunpack.c.l.b16 %v1555
  %v1620 = vunpack.c.l.b16 %v1556
  %v1621 = vunpack.c.l.b16 %v1557
  %v1622 = vunpack.c.l.b16 %v1558
  %v1623 = vunpack.c.l.b16 %v1559
  %v1624 = vunpack.c.l.b16 %v1560
  %v1625 = vunpack.c.l.b16 %v1561
  %v1626 = vunpack.c.l.b16 %v1562
  %v1627 = vpack.c.b16 %v1596, %v1595
  %v1628 = vpack.c.b16 %v1598, %v1597
  %v1629 = vpack.c.b16 %v1600, %v1599
  %v1630 = vpack.c.b16 %v1602, %v1601
  %v1631 = vpack.c.b16 %v1604, %v1603
  %v1632 = vpack.c.b16 %v1606, %v1605
  %v1633 = vpack.c.b16 %v1608, %v1607
  %v1634 = vpack.c.b16 %v1610, %v1609
  %v1635 = vpack.c.b16 %v1612, %v1611
  %v1636 = vpack.c.b16 %v1614, %v1613
  %v1637 = vpack.c.b16 %v1616, %v1615
  %v1638 = vpack.c.b16 %v1618, %v1617
  %v1639 = vpack.c.b16 %v1620, %v1619
  %v1640 = vpack.c.b16 %v1622, %v1621
  %v1641 = vpack.c.b16 %v1624, %v1623
  %v1642 = vpack.c.b16 %v1626, %v1625
  %1659 = vmatpush.bf16.msra.mxu0 %v1634
  %1660 = vmatpush.bf16.msra.mxu0 %v1633
  %1661 = vmatpush.bf16.msra.mxu0 %v1632
  %1662 = vmatpush.bf16.msra.mxu0 %v1631
  %1663 = vmatpush.bf16.msra.mxu0 %v1630
  %1664 = vmatpush.bf16.msra.mxu0 %v1629
  %1665 = vmatpush.bf16.msra.mxu0 %v1628
  %1666 = vmatpush.bf16.msra.mxu0 %v1627
  %1667 = vmatmul.bf16.gmra.mxu0 %v1361
  %v1668 = vpop.f32.mrf.mxu0
  %v1669 = vadd.f32 0.0, %v1668
  %v1670 = vpop.f32.mrf.mxu0
  %v1671 = vadd.f32 0.0, %v1670
  %1672 = vmatmul.bf16.gmra.mxu0 %v1363
  %v1673 = vpop.f32.mrf.mxu0
  %v1674 = vadd.f32 0.0, %v1673
  %v1675 = vpop.f32.mrf.mxu0
  %v1676 = vadd.f32 0.0, %v1675
  %1677 = vdwg.mxu0
  %1678 = vmatpush.bf16.msra.mxu0 %v1642
  %1679 = vmatpush.bf16.msra.mxu0 %v1641
  %1680 = vmatpush.bf16.msra.mxu0 %v1640
  %1681 = vmatpush.bf16.msra.mxu0 %v1639
  %1682 = vmatpush.bf16.msra.mxu0 %v1638
  %1683 = vmatpush.bf16.msra.mxu0 %v1637
  %1684 = vmatpush.bf16.msra.mxu0 %v1636
  %1685 = vmatpush.bf16.msra.mxu0 %v1635
  %1686 = vmatmul.bf16.gmra.mxu0 %v1362
  %v1687 = vpop.f32.mrf.mxu0
  %v1688 = vadd.f32 %v1669, %v1687
  %v1689 = vpop.f32.mrf.mxu0
  %v1690 = vadd.f32 %v1671, %v1689
  %1691 = vmatmul.bf16.gmra.mxu0 %v1364
  %v1692 = vpop.f32.mrf.mxu0
  %v1693 = vadd.f32 %v1674, %v1692
  %v1694 = vpop.f32.mrf.mxu0
  %v1695 = vadd.f32 %v1676, %v1694
  %1696 = vdwg.mxu0
  %v1697 = vmax.f32 %v1522, %v1688
  %v1698 = vmax.f32 %v1524, %v1690
  %v1699 = vmax.f32 %v1527, %v1693
  %v1700 = vmax.f32 %v1529, %v1695
  %v1701 = vrot.slane %v1697, 1
  %v1702 = vrot.slane %v1698, 1
  %v1703 = vrot.slane %v1699, 1
  %v1704 = vrot.slane %v1700, 1
  %v1705 = vsel %vm210, %v1703, %v1704
  %v1706 = vsel %vm210, %v1702, %v1703
  %v1707 = vsel %vm210, %v1701, %v1702
  %v1708 = vsel %vm210, %v1704, %v1701
  %v1709 = vmax.f32 %v1697, %v1707
  %v1710 = vmax.f32 %v1698, %v1706
  %v1711 = vmax.f32 %v1699, %v1705
  %v1712 = vmax.f32 %v1700, %v1708
  %v1713 = vld [vmem:[%s13] sm:$0xf]
  %v1714 = vld [vmem:[%s13 + $0x4] sm:$0xf]
  %v1715 = vpack.c.bf16 %v1710, %v1709
  %v1716 = vpack.c.bf16 %v1712, %v1711
  %v1719 = vunpack.c.l.b16 %v1713
  %v1720 = vunpack.c.l.b16 %v1714
  %v1721 = vpack.c.b16 %v1720, %v1719
  %vm1722 = vcmask 261120
  %v1724 = vsel %vm1722, %v1721, 0
  %1726 = vmatpush.bf16.msra.mxu0 0
  %1727 = vmatpush.bf16.msra.mxu0 0
  %1728 = vmatpush.bf16.msra.mxu0 0
  %1729 = vmatpush.bf16.msra.mxu0 0
  %1730 = vmatpush.bf16.msra.mxu0 0
  %1731 = vmatpush.bf16.msra.mxu0 0
  %1732 = vmatpush.bf16.msra.mxu0 %v1716
  %1733 = vmatpush.bf16.msra.mxu0 %v1715
  %1734 = vmatmul.bf16.gmra.mxu0 %v1724
  %v1735 = vpop.f32.mrf.mxu0
  %v1736 = vadd.f32 0.0, %v1735
  %v1737 = vpop.f32.mrf.mxu0
  %v1738 = vadd.f32 0.0, %v1737
  %1739 = vdwg.mxu0
  %v1740 = vpack.c.bf16 %v1736, %v1736
  %v1741 = vpack.c.bf16 %v1738, %v1738
  %1742 = vst [vmem:[%s14] sm:$0xf] %v1740
  %1743 = vst [vmem:[%s14 + $0x4] sm:$0xf] %v1741
  // Predicated region
  $region58: #{darknet_bottleneck.1} parent=0 // pred_check
    _
  $region59: #{darknet_bottleneck.1} parent=0 // pred_check_branch
    %1745 = sbr.rel (0) target = $region61
  $region60: #{darknet_bottleneck.1} parent=0 // pred_region
    _
  $region61: #{darknet_bottleneck.1} parent=0 // pred_fallthru
    _
  // Predicated region
  $region62: #{darknet_bottleneck.1} parent=0 // pred_check
    _
  $region63: #{darknet_bottleneck.1} parent=0 // pred_check_branch
    %1747 = sbr.rel (0) target = $region65
  $region64: #{darknet_bottleneck.1} parent=0 // pred_region
    _
  $region65: #{darknet_bottleneck.1} parent=0 // pred_fallthru
    _

</llo_original>
